<compile_context>
chip_gen: v5e
topology: v5e:2x2
jax: 0.10.0
libtpu: 0.0.40
codegen_flags: <defaults>
</compile_context>

<pallas_src>
import functools

import numpy as np
import jax
import jax.numpy as jnp
from jax import lax
from jax.experimental import pallas as pl
from jax.experimental.pallas import tpu as pltpu


# ----------------------------------------------------------------------------- #
# Pallas kernel
# ----------------------------------------------------------------------------- #
def stn_sample_kernel(x_ref, wy_ref, wxt_ref, o_ref, wxtk_ref, *, reuse_weights):
    # x_ref   : (1, tg*H, k*W)  lane-packed images (k images share the lane axis)
    # wy_ref  : (1, H, H)       row (y) interpolation matrix (per batch)
    # wxt_ref : (1, W, W)       column (x) interpolation matrix, transposed (Wx^T)
    # o_ref   : (1, tg*H, k*W)
    # wxtk_ref: (k*W, k*W)      VMEM scratch holding kron(I_k, Wx^T)
    H = wy_ref.shape[-1]
    W = wxt_ref.shape[-1]
    kW = wxtk_ref.shape[-1]
    k = kW // W
    tg = x_ref.shape[1] // H

    def build_wxtk():
        # kron(I_k, Wx^T) built with k full-lane stores: Wx^T @ P_kk places Wx^T
        # into lane-block kk (P_kk is a one-hot placement built from iota).
        wxt = wxt_ref[0]                                        # (W, W)
        r = lax.broadcasted_iota(jnp.int32, (W, kW), 0)
        c = lax.broadcasted_iota(jnp.int32, (W, kW), 1)
        for kk in range(k):
            place = (c == r + kk * W).astype(jnp.float32)       # (W, kW)
            wxtk_ref[kk * W:(kk + 1) * W, :] = jnp.dot(
                wxt, place, preferred_element_type=jnp.float32)

    if reuse_weights:
        # weights stay resident in scratch across the (sequential) M axis
        pl.when(pl.program_id(1) == 0)(build_wxtk)
    else:
        # B == 1: rebuild per step (cheap) so the M axis can be megacore-parallel
        build_wxtk()

    # Stage 1: W interpolation — one lane-dense MXU matmul over the whole tile.
    x = x_ref[0]                                                # (tg*H, kW)
    tmp = jnp.dot(x, wxtk_ref[...], preferred_element_type=jnp.float32)

    # Stage 2: H interpolation — per lane-group (H,H)@(H,kW) dots (linear in tile).
    wy = wy_ref[0]                                              # (H, H)
    for g in range(tg):
        sl = slice(g * H, (g + 1) * H)
        o_ref[0, sl, :] = jnp.dot(
            wy, tmp[sl, :], preferred_element_type=jnp.float32
        ).astype(o_ref.dtype)


# ----------------------------------------------------------------------------- #
# Glue: interpolation-matrix construction (align_corners=False, zeros padding).
# ----------------------------------------------------------------------------- #
def _interp_matrix(g_norm, n, transpose=False):
    """g_norm: (B, n_out) normalized sample coords in [-1, 1].

    Returns (B, n_out, n_in) weights, or (B, n_in, n_out) when transpose=True
    (built directly so no extra XLA transpose is needed)."""
    pix = ((g_norm + 1.0) * n - 1.0) / 2.0          # unnormalize (align_corners=False)
    i0 = jnp.floor(pix)
    w1 = pix - i0
    w0 = 1.0 - w1
    i0i = i0.astype(jnp.int32)
    i1i = i0i + 1
    v0 = ((i0i >= 0) & (i0i < n)).astype(jnp.float32)   # zeros padding mode
    v1 = ((i1i >= 0) & (i1i < n)).astype(jnp.float32)
    c0 = jnp.clip(i0i, 0, n - 1)
    c1 = jnp.clip(i1i, 0, n - 1)
    if transpose:
        oh0 = jax.nn.one_hot(c0, n, dtype=jnp.float32, axis=1)   # (B, n_in, n_out)
        oh1 = jax.nn.one_hot(c1, n, dtype=jnp.float32, axis=1)
        return oh0 * (w0 * v0)[:, None, :] + oh1 * (w1 * v1)[:, None, :]
    oh0 = jax.nn.one_hot(c0, n, dtype=jnp.float32)               # (B, n_out, n_in)
    oh1 = jax.nn.one_hot(c1, n, dtype=jnp.float32)
    return oh0 * (w0 * v0)[..., None] + oh1 * (w1 * v1)[..., None]


def _device_tuning():
    """(lane_width, per-step x-tile byte target) per TPU generation."""
    kind = ""
    try:
        kind = jax.devices()[0].device_kind.lower()
    except Exception:
        pass
    if any(v in kind for v in ("v2", "v3", "v4", "v5")):
        return 128, 256 * 1024          # 128-wide MXU, ~0.8 TB/s HBM
    if "v6" in kind:
        return 256, 512 * 1024          # 256-wide MXU, ~1.4 TB/s HBM
    return 256, 1024 * 1024             # v7x / unknown: 256-wide MXU, ~3.2 TB/s HBM


def _choose_packing(M, H, W, lane_width, tile_bytes):
    """k images packed per lane row; G = M//k lane-groups; tg groups per tile."""
    k = 1
    for lanes in (lane_width, 128):
        if lanes % W == 0 and M % (lanes // W) == 0:
            k = lanes // W
            break
    G = M // k
    kW = k * W

    # Tile target: big enough to amortize per-step overhead, capped so the
    # unrolled stage-2 loop stays small; tg must divide G and keep (tg*H) % 8 == 0.
    bytes_per_group = H * kW * 4
    cap = max(1, min(64, tile_bytes // bytes_per_group))
    tg = 1
    for d in range(1, G + 1):
        if G % d == 0 and d <= cap and (d * H) % 8 == 0:
            tg = d
    if (tg * H) % 8 != 0:
        tg = G                          # full-extent block keeps tiling legal
    return k, G, kW, tg


def stn_forward(x, theta):
    """x: (B, C, T, H, W) float32; theta: (B, 2, 3) diagonal-scale affine."""
    B, C, T, H, W = x.shape
    M = C * T

    # The separable fast path is only valid for diagonal theta (scale/translate),
    # which is all STN_API.forward produces (it only calls scale()).
    try:
        th = np.asarray(theta)
    except Exception:
        th = None
    if th is not None and not (np.allclose(th[:, 0, 1], 0.0)
                               and np.allclose(th[:, 1, 0], 0.0)):
        raise ValueError("stn_forward: theta must be diagonal (scale/translation); "
                         "rotation/shear would need a gather-based grid_sample.")

    lane_width, tile_bytes = _device_tuning()
    k, G, kW, tg = _choose_packing(M, H, W, lane_width, tile_bytes)
    tgH = tg * H
    n_mt = G // tg

    # affine_grid base coords (align_corners=False)
    bx = (2.0 * jnp.arange(W, dtype=jnp.float32) + 1.0) / W - 1.0   # (W,)
    by = (2.0 * jnp.arange(H, dtype=jnp.float32) + 1.0) / H - 1.0   # (H,)

    # separable grid for diagonal theta (translation column also supported)
    gx = theta[:, 0, 0][:, None] * bx[None, :] + theta[:, 0, 2][:, None]   # (B, W)
    gy = theta[:, 1, 1][:, None] * by[None, :] + theta[:, 1, 2][:, None]   # (B, H)

    wy = _interp_matrix(gy, H, transpose=False)    # (B, H, H)
    wxt = _interp_matrix(gx, W, transpose=True)    # (B, W, W) = Wx^T, built directly

    # lane-pack: (B, M, H, W) -> (B, G*H, k*W)
    # TODO(synk): this XLA transpose (and the inverse below) is the remaining
    # extra HBM traffic; an in-kernel swizzle would remove it.
    if k > 1:
        xp = (x.reshape(B, G, k, H, W)
               .transpose(0, 1, 3, 2, 4)
               .reshape(B, G * H, kW))
    else:
        xp = x.reshape(B, G * H, kW)               # free reshape, no transpose

    # If there is batch parallelism, keep weights resident across the M axis
    # (rebuild only at m == 0); if B == 1, rebuild per step so the M axis can be
    # split across TensorCores.
    reuse_weights = (B > 1) or (n_mt == 1)
    kernel = functools.partial(stn_sample_kernel, reuse_weights=reuse_weights)

    out_p = pl.pallas_call(
        kernel,
        out_shape=jax.ShapeDtypeStruct((B, G * H, kW), x.dtype),
        grid=(B, n_mt),
        in_specs=[
            pl.BlockSpec((1, tgH, kW), lambda b, m: (b, m, 0)),   # images (lane-dense)
            pl.BlockSpec((1, H, H), lambda b, m: (b, 0, 0)),      # Wy, resident per batch
            pl.BlockSpec((1, W, W), lambda b, m: (b, 0, 0)),      # Wx^T, resident per batch
        ],
        out_specs=pl.BlockSpec((1, tgH, kW), lambda b, m: (b, m, 0)),
        scratch_shapes=[pltpu.VMEM((kW, kW), jnp.float32)],       # kron(I_k, Wx^T)
        compiler_params=pltpu.CompilerParams(
            dimension_semantics=("parallel",
                                 "arbitrary" if reuse_weights else "parallel"),
            vmem_limit_bytes=32 * 1024 * 1024,
        ),
    )(xp, wy, wxt)

    # un-pack: (B, G*H, k*W) -> (B, C, T, H, W)
    if k > 1:
        out = (out_p.reshape(B, G, H, k, W)
                    .transpose(0, 1, 3, 2, 4)
                    .reshape(B, C, T, H, W))
    else:
        out = out_p.reshape(B, C, T, H, W)
    return out


# ----------------------------------------------------------------------------- #
# Pure-numpy reference: affine_grid + bilinear grid_sample (zeros padding).
# ----------------------------------------------------------------------------- #
def reference_forward(x, theta):
    x = np.asarray(x)
    theta = np.asarray(theta)
    B, C, T, H, W = x.shape
    bx = (2.0 * np.arange(W) + 1.0) / W - 1.0
    by = (2.0 * np.arange(H) + 1.0) / H - 1.0
    out = np.zeros_like(x)
    for b in range(B):
        gxm = theta[b, 0, 0] * bx[None, :] + theta[b, 0, 1] * by[:, None] + theta[b, 0, 2]
        gym = theta[b, 1, 0] * bx[None, :] + theta[b, 1, 1] * by[:, None] + theta[b, 1, 2]
        ix = ((gxm + 1.0) * W - 1.0) / 2.0
        iy = ((gym + 1.0) * H - 1.0) / 2.0
        x0 = np.floor(ix).astype(np.int64); x1 = x0 + 1
        y0 = np.floor(iy).astype(np.int64); y1 = y0 + 1
        wx1 = ix - x0; wx0 = 1.0 - wx1
        wy1 = iy - y0; wy0 = 1.0 - wy1

        def tap(img, yy, xx):
            valid = ((yy >= 0) & (yy < H) & (xx >= 0) & (xx < W)).astype(img.dtype)
            yyc = np.clip(yy, 0, H - 1)
            xxc = np.clip(xx, 0, W - 1)
            return img[yyc, xxc] * valid

        for c in range(C):
            for t in range(T):
                img = x[b, c, t]
                out[b, c, t] = (tap(img, y0, x0) * wy0 * wx0 +
                                tap(img, y0, x1) * wy0 * wx1 +
                                tap(img, y1, x0) * wy1 * wx0 +
                                tap(img, y1, x1) * wy1 * wx1)
    return out


if __name__ == "__main__":
    B, C, T, H, W = 2, 4, 8, 16, 16

    key = jax.random.PRNGKey(0)
    k_x, k_sx, k_sy = jax.random.split(key, 3)
    x = jax.random.normal(k_x, (B, C, T, H, W), dtype=jnp.float32)

    # Deterministic stand-in for the module's host-side RNG: scale() draws
    # sx, sy ~ U[0.85, 1.15] and sets theta[0,0]=cos(sx), theta[1,1]=cos(sy).
    sx = jax.random.uniform(k_sx, (B,), minval=0.85, maxval=1.15, dtype=jnp.float32)
    sy = jax.random.uniform(k_sy, (B,), minval=0.85, maxval=1.15, dtype=jnp.float32)
    theta = jnp.zeros((B, 2, 3), dtype=jnp.float32)
    theta = theta.at[:, 0, 0].set(jnp.cos(sx))
    theta = theta.at[:, 1, 1].set(jnp.cos(sy))

    out = stn_forward(x, theta)
    out = jax.block_until_ready(out)

    ref = reference_forward(x, theta)
    assert out.shape == (B, C, T, H, W)
    np.testing.assert_allclose(np.asarray(out), ref, atol=1e-4, rtol=1e-4)

    print("KERNEL_OK")
</pallas_src>

<mosaic_0001>
module attributes {stable_mosaic.version = 11 : i64} {
  func.func @stn_sample_kernel(%arg0: i32, %arg1: i32, %arg2: memref<1x32x256xf32, #tpu.memory_space<vmem>>, %arg3: memref<1x16x16xf32, #tpu.memory_space<vmem>>, %arg4: memref<1x16x16xf32, #tpu.memory_space<vmem>>, %arg5: memref<1x32x256xf32, #tpu.memory_space<vmem>>, %arg6: memref<256x256xf32, #tpu.memory_space<vmem>>) attributes {dimension_semantics = [#tpu.dimension_semantics<parallel>, #tpu.dimension_semantics<arbitrary>], iteration_bounds = array<i64: 2, 1>, scalar_prefetch = 0 : i64, scratch_operands = 1 : i64, tpu.core_type = #tpu.core_type<tc>, window_params = [{transform_indices = @transform_0, window_bounds = array<i64: 1, 32, 256>}, {transform_indices = @transform_1, window_bounds = array<i64: 1, 16, 16>}, {transform_indices = @transform_2, window_bounds = array<i64: 1, 16, 16>}, {transform_indices = @transform_3, window_bounds = array<i64: 1, 32, 256>}]} {
    %c0_i32 = arith.constant 0 : i32
    %0 = arith.cmpi eq, %arg1, %c0_i32 : i32
    %1 = arith.extui %0 : i1 to i32
    %c0_i32_0 = arith.constant 0 : i32
    %2 = arith.cmpi ne, %1, %c0_i32_0 : i32
    scf.if %2 {
      %c0_15 = arith.constant 0 : index
      %c0_16 = arith.constant 0 : index
      %c0_17 = arith.constant 0 : index
      %19 = vector.load %arg4[%c0_15, %c0_16, %c0_17] : memref<1x16x16xf32, #tpu.memory_space<vmem>>, vector<1x16x16xf32>
      %20 = vector.shape_cast %19 : vector<1x16x16xf32> to vector<16x16xf32>
      %21 = tpu.iota {dimensions = array<i32: 0>} : vector<16x256xi32>
      %22 = tpu.iota {dimensions = array<i32: 1>} : vector<16x256xi32>
      %c0_i32_18 = arith.constant 0 : i32
      %23 = vector.broadcast %c0_i32_18 : i32 to vector<16x256xi32>
      %24 = arith.addi %21, %23 : vector<16x256xi32>
      %25 = arith.cmpi eq, %22, %24 : vector<16x256xi32>
      %26 = arith.extui %25 : vector<16x256xi1> to vector<16x256xi32>
      %27 = arith.sitofp %26 : vector<16x256xi32> to vector<16x256xf32>
      %cst_19 = arith.constant dense<0.000000e+00> : vector<16x256xf32>
      %28 = tpu.matmul %20, %27, %cst_19 {dimension_numbers = #tpu.dot_dimension_numbers<[1], [0], [0], [1], [0, 0, 1, 1], [], []>} : vector<16x16xf32>, vector<16x256xf32>, vector<16x256xf32> -> vector<16x256xf32>
      %c0_20 = arith.constant 0 : index
      %c0_21 = arith.constant 0 : index
      %29 = vector.load %arg6[%c0_20, %c0_21] : memref<256x256xf32, #tpu.memory_space<vmem>>, vector<16x256xf32>
      tpu.vector_store %arg6[%c0_20, %c0_21], %28 {strides = array<i32>} : memref<256x256xf32, #tpu.memory_space<vmem>>, vector<16x256xf32>,
      %c16_i32 = arith.constant 16 : i32
      %30 = vector.broadcast %c16_i32 : i32 to vector<16x256xi32>
      %31 = arith.addi %21, %30 : vector<16x256xi32>
      %32 = arith.cmpi eq, %22, %31 : vector<16x256xi32>
      %33 = arith.extui %32 : vector<16x256xi1> to vector<16x256xi32>
      %34 = arith.sitofp %33 : vector<16x256xi32> to vector<16x256xf32>
      %cst_22 = arith.constant dense<0.000000e+00> : vector<16x256xf32>
      %35 = tpu.matmul %20, %34, %cst_22 {dimension_numbers = #tpu.dot_dimension_numbers<[1], [0], [0], [1], [0, 0, 1, 1], [], []>} : vector<16x16xf32>, vector<16x256xf32>, vector<16x256xf32> -> vector<16x256xf32>
      %c16_23 = arith.constant 16 : index
      %c0_24 = arith.constant 0 : index
      %36 = vector.load %arg6[%c16_23, %c0_24] : memref<256x256xf32, #tpu.memory_space<vmem>>, vector<16x256xf32>
      tpu.vector_store %arg6[%c16_23, %c0_24], %35 {strides = array<i32>} : memref<256x256xf32, #tpu.memory_space<vmem>>, vector<16x256xf32>,
      %c32_i32 = arith.constant 32 : i32
      %37 = vector.broadcast %c32_i32 : i32 to vector<16x256xi32>
      %38 = arith.addi %21, %37 : vector<16x256xi32>
      %39 = arith.cmpi eq, %22, %38 : vector<16x256xi32>
      %40 = arith.extui %39 : vector<16x256xi1> to vector<16x256xi32>
      %41 = arith.sitofp %40 : vector<16x256xi32> to vector<16x256xf32>
      %cst_25 = arith.constant dense<0.000000e+00> : vector<16x256xf32>
      %42 = tpu.matmul %20, %41, %cst_25 {dimension_numbers = #tpu.dot_dimension_numbers<[1], [0], [0], [1], [0, 0, 1, 1], [], []>} : vector<16x16xf32>, vector<16x256xf32>, vector<16x256xf32> -> vector<16x256xf32>
      %c32 = arith.constant 32 : index
      %c0_26 = arith.constant 0 : index
      %43 = vector.load %arg6[%c32, %c0_26] : memref<256x256xf32, #tpu.memory_space<vmem>>, vector<16x256xf32>
      tpu.vector_store %arg6[%c32, %c0_26], %42 {strides = array<i32>} : memref<256x256xf32, #tpu.memory_space<vmem>>, vector<16x256xf32>,
      %c48_i32 = arith.constant 48 : i32
      %44 = vector.broadcast %c48_i32 : i32 to vector<16x256xi32>
      %45 = arith.addi %21, %44 : vector<16x256xi32>
      %46 = arith.cmpi eq, %22, %45 : vector<16x256xi32>
      %47 = arith.extui %46 : vector<16x256xi1> to vector<16x256xi32>
      %48 = arith.sitofp %47 : vector<16x256xi32> to vector<16x256xf32>
      %cst_27 = arith.constant dense<0.000000e+00> : vector<16x256xf32>
      %49 = tpu.matmul %20, %48, %cst_27 {dimension_numbers = #tpu.dot_dimension_numbers<[1], [0], [0], [1], [0, 0, 1, 1], [], []>} : vector<16x16xf32>, vector<16x256xf32>, vector<16x256xf32> -> vector<16x256xf32>
      %c48 = arith.constant 48 : index
      %c0_28 = arith.constant 0 : index
      %50 = vector.load %arg6[%c48, %c0_28] : memref<256x256xf32, #tpu.memory_space<vmem>>, vector<16x256xf32>
      tpu.vector_store %arg6[%c48, %c0_28], %49 {strides = array<i32>} : memref<256x256xf32, #tpu.memory_space<vmem>>, vector<16x256xf32>,
      %c64_i32 = arith.constant 64 : i32
      %51 = vector.broadcast %c64_i32 : i32 to vector<16x256xi32>
      %52 = arith.addi %21, %51 : vector<16x256xi32>
      %53 = arith.cmpi eq, %22, %52 : vector<16x256xi32>
      %54 = arith.extui %53 : vector<16x256xi1> to vector<16x256xi32>
      %55 = arith.sitofp %54 : vector<16x256xi32> to vector<16x256xf32>
      %cst_29 = arith.constant dense<0.000000e+00> : vector<16x256xf32>
      %56 = tpu.matmul %20, %55, %cst_29 {dimension_numbers = #tpu.dot_dimension_numbers<[1], [0], [0], [1], [0, 0, 1, 1], [], []>} : vector<16x16xf32>, vector<16x256xf32>, vector<16x256xf32> -> vector<16x256xf32>
      %c64 = arith.constant 64 : index
      %c0_30 = arith.constant 0 : index
      %57 = vector.load %arg6[%c64, %c0_30] : memref<256x256xf32, #tpu.memory_space<vmem>>, vector<16x256xf32>
      tpu.vector_store %arg6[%c64, %c0_30], %56 {strides = array<i32>} : memref<256x256xf32, #tpu.memory_space<vmem>>, vector<16x256xf32>,
      %c80_i32 = arith.constant 80 : i32
      %58 = vector.broadcast %c80_i32 : i32 to vector<16x256xi32>
      %59 = arith.addi %21, %58 : vector<16x256xi32>
      %60 = arith.cmpi eq, %22, %59 : vector<16x256xi32>
      %61 = arith.extui %60 : vector<16x256xi1> to vector<16x256xi32>
      %62 = arith.sitofp %61 : vector<16x256xi32> to vector<16x256xf32>
      %cst_31 = arith.constant dense<0.000000e+00> : vector<16x256xf32>
      %63 = tpu.matmul %20, %62, %cst_31 {dimension_numbers = #tpu.dot_dimension_numbers<[1], [0], [0], [1], [0, 0, 1, 1], [], []>} : vector<16x16xf32>, vector<16x256xf32>, vector<16x256xf32> -> vector<16x256xf32>
      %c80 = arith.constant 80 : index
      %c0_32 = arith.constant 0 : index
      %64 = vector.load %arg6[%c80, %c0_32] : memref<256x256xf32, #tpu.memory_space<vmem>>, vector<16x256xf32>
      tpu.vector_store %arg6[%c80, %c0_32], %63 {strides = array<i32>} : memref<256x256xf32, #tpu.memory_space<vmem>>, vector<16x256xf32>,
      %c96_i32 = arith.constant 96 : i32
      %65 = vector.broadcast %c96_i32 : i32 to vector<16x256xi32>
      %66 = arith.addi %21, %65 : vector<16x256xi32>
      %67 = arith.cmpi eq, %22, %66 : vector<16x256xi32>
      %68 = arith.extui %67 : vector<16x256xi1> to vector<16x256xi32>
      %69 = arith.sitofp %68 : vector<16x256xi32> to vector<16x256xf32>
      %cst_33 = arith.constant dense<0.000000e+00> : vector<16x256xf32>
      %70 = tpu.matmul %20, %69, %cst_33 {dimension_numbers = #tpu.dot_dimension_numbers<[1], [0], [0], [1], [0, 0, 1, 1], [], []>} : vector<16x16xf32>, vector<16x256xf32>, vector<16x256xf32> -> vector<16x256xf32>
      %c96 = arith.constant 96 : index
      %c0_34 = arith.constant 0 : index
      %71 = vector.load %arg6[%c96, %c0_34] : memref<256x256xf32, #tpu.memory_space<vmem>>, vector<16x256xf32>
      tpu.vector_store %arg6[%c96, %c0_34], %70 {strides = array<i32>} : memref<256x256xf32, #tpu.memory_space<vmem>>, vector<16x256xf32>,
      %c112_i32 = arith.constant 112 : i32
      %72 = vector.broadcast %c112_i32 : i32 to vector<16x256xi32>
      %73 = arith.addi %21, %72 : vector<16x256xi32>
      %74 = arith.cmpi eq, %22, %73 : vector<16x256xi32>
      %75 = arith.extui %74 : vector<16x256xi1> to vector<16x256xi32>
      %76 = arith.sitofp %75 : vector<16x256xi32> to vector<16x256xf32>
      %cst_35 = arith.constant dense<0.000000e+00> : vector<16x256xf32>
      %77 = tpu.matmul %20, %76, %cst_35 {dimension_numbers = #tpu.dot_dimension_numbers<[1], [0], [0], [1], [0, 0, 1, 1], [], []>} : vector<16x16xf32>, vector<16x256xf32>, vector<16x256xf32> -> vector<16x256xf32>
      %c112 = arith.constant 112 : index
      %c0_36 = arith.constant 0 : index
      %78 = vector.load %arg6[%c112, %c0_36] : memref<256x256xf32, #tpu.memory_space<vmem>>, vector<16x256xf32>
      tpu.vector_store %arg6[%c112, %c0_36], %77 {strides = array<i32>} : memref<256x256xf32, #tpu.memory_space<vmem>>, vector<16x256xf32>,
      %c128_i32 = arith.constant 128 : i32
      %79 = vector.broadcast %c128_i32 : i32 to vector<16x256xi32>
      %80 = arith.addi %21, %79 : vector<16x256xi32>
      %81 = arith.cmpi eq, %22, %80 : vector<16x256xi32>
      %82 = arith.extui %81 : vector<16x256xi1> to vector<16x256xi32>
      %83 = arith.sitofp %82 : vector<16x256xi32> to vector<16x256xf32>
      %cst_37 = arith.constant dense<0.000000e+00> : vector<16x256xf32>
      %84 = tpu.matmul %20, %83, %cst_37 {dimension_numbers = #tpu.dot_dimension_numbers<[1], [0], [0], [1], [0, 0, 1, 1], [], []>} : vector<16x16xf32>, vector<16x256xf32>, vector<16x256xf32> -> vector<16x256xf32>
      %c128 = arith.constant 128 : index
      %c0_38 = arith.constant 0 : index
      %85 = vector.load %arg6[%c128, %c0_38] : memref<256x256xf32, #tpu.memory_space<vmem>>, vector<16x256xf32>
      tpu.vector_store %arg6[%c128, %c0_38], %84 {strides = array<i32>} : memref<256x256xf32, #tpu.memory_space<vmem>>, vector<16x256xf32>,
      %c144_i32 = arith.constant 144 : i32
      %86 = vector.broadcast %c144_i32 : i32 to vector<16x256xi32>
      %87 = arith.addi %21, %86 : vector<16x256xi32>
      %88 = arith.cmpi eq, %22, %87 : vector<16x256xi32>
      %89 = arith.extui %88 : vector<16x256xi1> to vector<16x256xi32>
      %90 = arith.sitofp %89 : vector<16x256xi32> to vector<16x256xf32>
      %cst_39 = arith.constant dense<0.000000e+00> : vector<16x256xf32>
      %91 = tpu.matmul %20, %90, %cst_39 {dimension_numbers = #tpu.dot_dimension_numbers<[1], [0], [0], [1], [0, 0, 1, 1], [], []>} : vector<16x16xf32>, vector<16x256xf32>, vector<16x256xf32> -> vector<16x256xf32>
      %c144 = arith.constant 144 : index
      %c0_40 = arith.constant 0 : index
      %92 = vector.load %arg6[%c144, %c0_40] : memref<256x256xf32, #tpu.memory_space<vmem>>, vector<16x256xf32>
      tpu.vector_store %arg6[%c144, %c0_40], %91 {strides = array<i32>} : memref<256x256xf32, #tpu.memory_space<vmem>>, vector<16x256xf32>,
      %c160_i32 = arith.constant 160 : i32
      %93 = vector.broadcast %c160_i32 : i32 to vector<16x256xi32>
      %94 = arith.addi %21, %93 : vector<16x256xi32>
      %95 = arith.cmpi eq, %22, %94 : vector<16x256xi32>
      %96 = arith.extui %95 : vector<16x256xi1> to vector<16x256xi32>
      %97 = arith.sitofp %96 : vector<16x256xi32> to vector<16x256xf32>
      %cst_41 = arith.constant dense<0.000000e+00> : vector<16x256xf32>
      %98 = tpu.matmul %20, %97, %cst_41 {dimension_numbers = #tpu.dot_dimension_numbers<[1], [0], [0], [1], [0, 0, 1, 1], [], []>} : vector<16x16xf32>, vector<16x256xf32>, vector<16x256xf32> -> vector<16x256xf32>
      %c160 = arith.constant 160 : index
      %c0_42 = arith.constant 0 : index
      %99 = vector.load %arg6[%c160, %c0_42] : memref<256x256xf32, #tpu.memory_space<vmem>>, vector<16x256xf32>
      tpu.vector_store %arg6[%c160, %c0_42], %98 {strides = array<i32>} : memref<256x256xf32, #tpu.memory_space<vmem>>, vector<16x256xf32>,
      %c176_i32 = arith.constant 176 : i32
      %100 = vector.broadcast %c176_i32 : i32 to vector<16x256xi32>
      %101 = arith.addi %21, %100 : vector<16x256xi32>
      %102 = arith.cmpi eq, %22, %101 : vector<16x256xi32>
      %103 = arith.extui %102 : vector<16x256xi1> to vector<16x256xi32>
      %104 = arith.sitofp %103 : vector<16x256xi32> to vector<16x256xf32>
      %cst_43 = arith.constant dense<0.000000e+00> : vector<16x256xf32>
      %105 = tpu.matmul %20, %104, %cst_43 {dimension_numbers = #tpu.dot_dimension_numbers<[1], [0], [0], [1], [0, 0, 1, 1], [], []>} : vector<16x16xf32>, vector<16x256xf32>, vector<16x256xf32> -> vector<16x256xf32>
      %c176 = arith.constant 176 : index
      %c0_44 = arith.constant 0 : index
      %106 = vector.load %arg6[%c176, %c0_44] : memref<256x256xf32, #tpu.memory_space<vmem>>, vector<16x256xf32>
      tpu.vector_store %arg6[%c176, %c0_44], %105 {strides = array<i32>} : memref<256x256xf32, #tpu.memory_space<vmem>>, vector<16x256xf32>,
      %c192_i32 = arith.constant 192 : i32
      %107 = vector.broadcast %c192_i32 : i32 to vector<16x256xi32>
      %108 = arith.addi %21, %107 : vector<16x256xi32>
      %109 = arith.cmpi eq, %22, %108 : vector<16x256xi32>
      %110 = arith.extui %109 : vector<16x256xi1> to vector<16x256xi32>
      %111 = arith.sitofp %110 : vector<16x256xi32> to vector<16x256xf32>
      %cst_45 = arith.constant dense<0.000000e+00> : vector<16x256xf32>
      %112 = tpu.matmul %20, %111, %cst_45 {dimension_numbers = #tpu.dot_dimension_numbers<[1], [0], [0], [1], [0, 0, 1, 1], [], []>} : vector<16x16xf32>, vector<16x256xf32>, vector<16x256xf32> -> vector<16x256xf32>
      %c192 = arith.constant 192 : index
      %c0_46 = arith.constant 0 : index
      %113 = vector.load %arg6[%c192, %c0_46] : memref<256x256xf32, #tpu.memory_space<vmem>>, vector<16x256xf32>
      tpu.vector_store %arg6[%c192, %c0_46], %112 {strides = array<i32>} : memref<256x256xf32, #tpu.memory_space<vmem>>, vector<16x256xf32>,
      %c208_i32 = arith.constant 208 : i32
      %114 = vector.broadcast %c208_i32 : i32 to vector<16x256xi32>
      %115 = arith.addi %21, %114 : vector<16x256xi32>
      %116 = arith.cmpi eq, %22, %115 : vector<16x256xi32>
      %117 = arith.extui %116 : vector<16x256xi1> to vector<16x256xi32>
      %118 = arith.sitofp %117 : vector<16x256xi32> to vector<16x256xf32>
      %cst_47 = arith.constant dense<0.000000e+00> : vector<16x256xf32>
      %119 = tpu.matmul %20, %118, %cst_47 {dimension_numbers = #tpu.dot_dimension_numbers<[1], [0], [0], [1], [0, 0, 1, 1], [], []>} : vector<16x16xf32>, vector<16x256xf32>, vector<16x256xf32> -> vector<16x256xf32>
      %c208 = arith.constant 208 : index
      %c0_48 = arith.constant 0 : index
      %120 = vector.load %arg6[%c208, %c0_48] : memref<256x256xf32, #tpu.memory_space<vmem>>, vector<16x256xf32>
      tpu.vector_store %arg6[%c208, %c0_48], %119 {strides = array<i32>} : memref<256x256xf32, #tpu.memory_space<vmem>>, vector<16x256xf32>,
      %c224_i32 = arith.constant 224 : i32
      %121 = vector.broadcast %c224_i32 : i32 to vector<16x256xi32>
      %122 = arith.addi %21, %121 : vector<16x256xi32>
      %123 = arith.cmpi eq, %22, %122 : vector<16x256xi32>
      %124 = arith.extui %123 : vector<16x256xi1> to vector<16x256xi32>
      %125 = arith.sitofp %124 : vector<16x256xi32> to vector<16x256xf32>
      %cst_49 = arith.constant dense<0.000000e+00> : vector<16x256xf32>
      %126 = tpu.matmul %20, %125, %cst_49 {dimension_numbers = #tpu.dot_dimension_numbers<[1], [0], [0], [1], [0, 0, 1, 1], [], []>} : vector<16x16xf32>, vector<16x256xf32>, vector<16x256xf32> -> vector<16x256xf32>
      %c224 = arith.constant 224 : index
      %c0_50 = arith.constant 0 : index
      %127 = vector.load %arg6[%c224, %c0_50] : memref<256x256xf32, #tpu.memory_space<vmem>>, vector<16x256xf32>
      tpu.vector_store %arg6[%c224, %c0_50], %126 {strides = array<i32>} : memref<256x256xf32, #tpu.memory_space<vmem>>, vector<16x256xf32>,
      %c240_i32 = arith.constant 240 : i32
      %128 = vector.broadcast %c240_i32 : i32 to vector<16x256xi32>
      %129 = arith.addi %21, %128 : vector<16x256xi32>
      %130 = arith.cmpi eq, %22, %129 : vector<16x256xi32>
      %131 = arith.extui %130 : vector<16x256xi1> to vector<16x256xi32>
      %132 = arith.sitofp %131 : vector<16x256xi32> to vector<16x256xf32>
      %cst_51 = arith.constant dense<0.000000e+00> : vector<16x256xf32>
      %133 = tpu.matmul %20, %132, %cst_51 {dimension_numbers = #tpu.dot_dimension_numbers<[1], [0], [0], [1], [0, 0, 1, 1], [], []>} : vector<16x16xf32>, vector<16x256xf32>, vector<16x256xf32> -> vector<16x256xf32>
      %c240 = arith.constant 240 : index
      %c0_52 = arith.constant 0 : index
      %134 = vector.load %arg6[%c240, %c0_52] : memref<256x256xf32, #tpu.memory_space<vmem>>, vector<16x256xf32>
      tpu.vector_store %arg6[%c240, %c0_52], %133 {strides = array<i32>} : memref<256x256xf32, #tpu.memory_space<vmem>>, vector<16x256xf32>,
    } else {
    }
    %c0 = arith.constant 0 : index
    %c0_1 = arith.constant 0 : index
    %c0_2 = arith.constant 0 : index
    %3 = vector.load %arg2[%c0, %c0_1, %c0_2] : memref<1x32x256xf32, #tpu.memory_space<vmem>>, vector<1x32x256xf32>
    %4 = vector.shape_cast %3 : vector<1x32x256xf32> to vector<32x256xf32>
    %c0_3 = arith.constant 0 : index
    %c0_4 = arith.constant 0 : index
    %5 = vector.load %arg6[%c0_3, %c0_4] : memref<256x256xf32, #tpu.memory_space<vmem>>, vector<256x256xf32>
    %cst = arith.constant dense<0.000000e+00> : vector<32x256xf32>
    %6 = tpu.matmul %4, %5, %cst {dimension_numbers = #tpu.dot_dimension_numbers<[1], [0], [0], [1], [0, 0, 1, 1], [], []>} : vector<32x256xf32>, vector<256x256xf32>, vector<32x256xf32> -> vector<32x256xf32>
    %c0_5 = arith.constant 0 : index
    %c0_6 = arith.constant 0 : index
    %c0_7 = arith.constant 0 : index
    %7 = vector.load %arg3[%c0_5, %c0_6, %c0_7] : memref<1x16x16xf32, #tpu.memory_space<vmem>>, vector<1x16x16xf32>
    %8 = vector.shape_cast %7 : vector<1x16x16xf32> to vector<16x16xf32>
    %9 = vector.extract_strided_slice %6 {offsets = [0, 0], sizes = [16, 256], strides = [1, 1]} : vector<32x256xf32> to vector<16x256xf32>
    %cst_8 = arith.constant dense<0.000000e+00> : vector<16x256xf32>
    %10 = tpu.matmul %8, %9, %cst_8 {dimension_numbers = #tpu.dot_dimension_numbers<[1], [0], [0], [1], [0, 0, 1, 1], [], []>} : vector<16x16xf32>, vector<16x256xf32>, vector<16x256xf32> -> vector<16x256xf32>
    %c0_9 = arith.constant 0 : index
    %c0_10 = arith.constant 0 : index
    %c0_11 = arith.constant 0 : index
    %11 = vector.load %arg5[%c0_9, %c0_10, %c0_11] : memref<1x32x256xf32, #tpu.memory_space<vmem>>, vector<1x16x256xf32>
    %12 = vector.shape_cast %11 : vector<1x16x256xf32> to vector<16x256xf32>
    %13 = vector.shape_cast %10 : vector<16x256xf32> to vector<1x16x256xf32>
    tpu.vector_store %arg5[%c0_9, %c0_10, %c0_11], %13 {strides = array<i32>} : memref<1x32x256xf32, #tpu.memory_space<vmem>>, vector<1x16x256xf32>,
    %14 = vector.extract_strided_slice %6 {offsets = [16, 0], sizes = [16, 256], strides = [1, 1]} : vector<32x256xf32> to vector<16x256xf32>
    %cst_12 = arith.constant dense<0.000000e+00> : vector<16x256xf32>
    %15 = tpu.matmul %8, %14, %cst_12 {dimension_numbers = #tpu.dot_dimension_numbers<[1], [0], [0], [1], [0, 0, 1, 1], [], []>} : vector<16x16xf32>, vector<16x256xf32>, vector<16x256xf32> -> vector<16x256xf32>
    %c0_13 = arith.constant 0 : index
    %c16 = arith.constant 16 : index
    %c0_14 = arith.constant 0 : index
    %16 = vector.load %arg5[%c0_13, %c16, %c0_14] : memref<1x32x256xf32, #tpu.memory_space<vmem>>, vector<1x16x256xf32>
    %17 = vector.shape_cast %16 : vector<1x16x256xf32> to vector<16x256xf32>
    %18 = vector.shape_cast %15 : vector<16x256xf32> to vector<1x16x256xf32>
    tpu.vector_store %arg5[%c0_13, %c16, %c0_14], %18 {strides = array<i32>} : memref<1x32x256xf32, #tpu.memory_space<vmem>>, vector<1x16x256xf32>,
    return
  }
  func.func @transform_0(%arg0: i32, %arg1: i32) -> (i32, i32, i32) {
    %c0_i32 = arith.constant 0 : i32
    %c0_i32_0 = arith.constant 0 : i32
    return %arg0, %arg1, %c0_i32 : i32, i32, i32
  }
  func.func @transform_1(%arg0: i32, %arg1: i32) -> (i32, i32, i32) {
    %c0_i32 = arith.constant 0 : i32
    %c0_i32_0 = arith.constant 0 : i32
    %c0_i32_1 = arith.constant 0 : i32
    return %arg0, %c0_i32, %c0_i32_0 : i32, i32, i32
  }
  func.func @transform_2(%arg0: i32, %arg1: i32) -> (i32, i32, i32) {
    %c0_i32 = arith.constant 0 : i32
    %c0_i32_0 = arith.constant 0 : i32
    %c0_i32_1 = arith.constant 0 : i32
    return %arg0, %c0_i32, %c0_i32_0 : i32, i32, i32
  }
  func.func @transform_3(%arg0: i32, %arg1: i32) -> (i32, i32, i32) {
    %c0_i32 = arith.constant 0 : i32
    %c0_i32_0 = arith.constant 0 : i32
    return %arg0, %arg1, %c0_i32 : i32, i32, i32
  }
}

</mosaic_0001>

<llo_original>
// kernel: tpu_custom_call.1
$region0: #{tpu_custom_call.1}
  #allocation0 [shape = 'u32[]', space=smem, size = 0x4, offset = 0x4, fixed_abs, tag = 'smem constant byte address 0x4 - core index']
  #allocation1 [shape = 'u32[72,128]{1,0:T(1,128)}', space=vmem, size = 0x9000, scoped, tag = 'internal scratch']
  #allocation2 [shape = 'f32[256,256]{1,0:T(8,128)}', space=vmem, size = 0x40000, scoped, tag = 'scratch operand']
  %s0 = inlined_call_operand.hbm [shape: f32[2,32,256], index: 0, kind: input, shape index: {}]
  %s1 = inlined_call_operand.hbm [shape: f32[2,16,16], index: 1, kind: input, shape index: {}]
  %s2 = inlined_call_operand.hbm [shape: f32[2,16,16], index: 2, kind: input, shape index: {}]
  %s3 = inlined_call_operand.hbm [shape: f32[2,32,256], index: 3, kind: output, shape index: {}]
  %s4 = sld [smem:[#allocation0]]
  $region61: #{tpu_custom_call.1} parent=0
    _
  %s6 = ssub.s32 1, %s4
  %s7 = scalar_select 0, %s6, %s4
  $region1: #{tpu_custom_call.1} parent=0
    #allocation3 [shape = 'u8[65536]{0}', space=vmem, size = 0x10000, scoped, tag = 'input window, operand 0']
    #allocation4 [shape = 's32[2]{0}', space=sflag, size = 0x8, scoped, tag = 'scoped memory for tpu_custom_call.1']
    #allocation5 [shape = 's32[2]{0}', space=sflag, size = 0x8, scoped, tag = 'scoped memory for tpu_custom_call.1']
    #allocation6 [shape = 'u8[16384]{0}', space=vmem, size = 0x4000, scoped, tag = 'input window, operand 1']
    #allocation7 [shape = 's32[2]{0}', space=sflag, size = 0x8, scoped, tag = 'scoped memory for tpu_custom_call.1']
    #allocation8 [shape = 'u8[16384]{0}', space=vmem, size = 0x4000, scoped, tag = 'input window, operand 2']
    #allocation9 [shape = 'u8[65536]{0}', space=vmem, size = 0x10000, scoped, tag = 'output window, operand 0']
    %8 = vsyncpa [#allocation4], 0
    %s9 = scalar_lea.sflag [#allocation4], 1
    %10 = vsyncpa %s9, 0
    %11 = vsyncpa [#allocation7], 0
    %s12 = scalar_lea.sflag [#allocation7], 1
    %13 = vsyncpa %s12, 0
    %14 = vsyncpa [#allocation5], 0
    %s15 = scalar_lea.sflag [#allocation5], 1
    %16 = vsyncpa %s15, 0
    loop: start=0, step=1, limit=4
    $region2: #{tpu_custom_call.1} parent=1 // loop_pre_header
      _
    $region3: #{tpu_custom_call.1} parent=1 // loop_header
      %s18 = sphi 0, %s22
      %p19 = scmp.ge.s32.totalorder %s18, 4
      %s25 = sphi 0, %s37
      %s26 = sphi 0, %s33
      %s27 = sphi 0, %s25
      %s28 = sphi 0, %s26
      %s29 = sphi 0, %s27
      %s30 = sphi 0, %s28
      %s42 = sphi 0, %s44
      %s45 = sphi 0, %s42
      %s46 = sphi 0, %s45
      %s62 = sphi 0, %s46
      %s68 = sphi 0, %s70
      %s71 = sphi 0, %s68
      %s72 = sphi 0, %s71
      %s88 = sphi 0, %s72
      %s94 = sphi 0, %s96
      %s97 = sphi 0, %s94
      %s98 = sphi 0, %s97
      %s114 = sphi 0, %s98
      %s122 = sphi 0, %s124
      %s125 = sphi 0, %s122
      %s126 = sphi 0, %s125
      %s142 = sphi 0, %s126
    $region4: #{tpu_custom_call.1} parent=1 // loop_header_branch
      %21 = sbr.rel (%p19) target = $region8
    $region5: #{tpu_custom_call.1} parent=1 // loop_body
      %s23 = ssub.s32 %s18, 1
      %s24 = ssub.s32 %s18, 2
      %s31 = sadd.s32 1, %s26
      %p32 = scmp.ge.s32.totalorder %s31, 1
      %s33 = scalar_select %p32, 0, %s31
      %s34 = sadd.s32 1, %s25
      %s35 = scalar_select %p32, %s34, %s25
      %p36 = scmp.ge.s32.totalorder %s35, 2
      %s37 = scalar_select %p36, 0, %s35
      %s38 = ssub.s32 %s25, %s37
      %s39 = ssub.s32 %s26, %s33
      %s40 = sor.u32 %s38, %s39
      %p41 = scmp.eq.s32.totalorder %s40, 0
      %s43 = sadd.s32 %s42, 1
      %s44 = scalar_select %p41, %s42, %s43
      %p47 = pneg %p41
      %p48 = scmp.eq.s32.totalorder %s18, 1
      %p49 = por %p47, %p48
      %p50 = scmp.ne.s32.totalorder %s42, %s45
      %p51 = scmp.eq.s32.totalorder %s18, 0
      %p52 = por %p50, %p51
      %p53 = scmp.ne.s32.totalorder %s42, %s45
      %p54 = scmp.eq.s32.totalorder %s23, 1
      %p55 = por %p53, %p54
      %p56 = scmp.ne.s32.totalorder %s45, %s46
      %p57 = scmp.eq.s32.totalorder %s23, 0
      %p58 = por %p56, %p57
      %p59 = scmp.ne.s32.totalorder %s45, %s46
      %p60 = scmp.eq.s32.totalorder %s24, 1
      %p61 = por %p59, %p60
      %p63 = scmp.ne.s32.totalorder %s46, %s62
      %p64 = scmp.eq.s32.totalorder %s24, 0
      %p65 = por %p63, %p64
      %s66 = ssub.s32 %s25, %s37
      %p67 = scmp.eq.s32.totalorder %s66, 0
      %s69 = sadd.s32 %s68, 1
      %s70 = scalar_select %p67, %s68, %s69
      %p73 = pneg %p67
      %p74 = scmp.eq.s32.totalorder %s18, 1
      %p75 = por %p73, %p74
      %p76 = scmp.ne.s32.totalorder %s68, %s71
      %p77 = scmp.eq.s32.totalorder %s18, 0
      %p78 = por %p76, %p77
      %p79 = scmp.ne.s32.totalorder %s68, %s71
      %p80 = scmp.eq.s32.totalorder %s23, 1
      %p81 = por %p79, %p80
      %p82 = scmp.ne.s32.totalorder %s71, %s72
      %p83 = scmp.eq.s32.totalorder %s23, 0
      %p84 = por %p82, %p83
      %p85 = scmp.ne.s32.totalorder %s71, %s72
      %p86 = scmp.eq.s32.totalorder %s24, 1
      %p87 = por %p85, %p86
      %p89 = scmp.ne.s32.totalorder %s72, %s88
      %p90 = scmp.eq.s32.totalorder %s24, 0
      %p91 = por %p89, %p90
      %s92 = ssub.s32 %s25, %s37
      %p93 = scmp.eq.s32.totalorder %s92, 0
      %s95 = sadd.s32 %s94, 1
      %s96 = scalar_select %p93, %s94, %s95
      %p99 = pneg %p93
      %p100 = scmp.eq.s32.totalorder %s18, 1
      %p101 = por %p99, %p100
      %p102 = scmp.ne.s32.totalorder %s94, %s97
      %p103 = scmp.eq.s32.totalorder %s18, 0
      %p104 = por %p102, %p103
      %p105 = scmp.ne.s32.totalorder %s94, %s97
      %p106 = scmp.eq.s32.totalorder %s23, 1
      %p107 = por %p105, %p106
      %p108 = scmp.ne.s32.totalorder %s97, %s98
      %p109 = scmp.eq.s32.totalorder %s23, 0
      %p110 = por %p108, %p109
      %p111 = scmp.ne.s32.totalorder %s97, %s98
      %p112 = scmp.eq.s32.totalorder %s24, 1
      %p113 = por %p111, %p112
      %p115 = scmp.ne.s32.totalorder %s98, %s114
      %p116 = scmp.eq.s32.totalorder %s24, 0
      %p117 = por %p115, %p116
      %s118 = ssub.s32 %s25, %s37
      %s119 = ssub.s32 %s26, %s33
      %s120 = sor.u32 %s118, %s119
      %p121 = scmp.eq.s32.totalorder %s120, 0
      %s123 = sadd.s32 %s122, 1
      %s124 = scalar_select %p121, %s122, %s123
      %p127 = pneg %p121
      %p128 = scmp.eq.s32.totalorder %s18, 1
      %p129 = por %p127, %p128
      %p130 = scmp.ne.s32.totalorder %s122, %s125
      %p131 = scmp.eq.s32.totalorder %s18, 0
      %p132 = por %p130, %p131
      %p133 = scmp.ne.s32.totalorder %s122, %s125
      %p134 = scmp.eq.s32.totalorder %s23, 1
      %p135 = por %p133, %p134
      %p136 = scmp.ne.s32.totalorder %s125, %s126
      %p137 = scmp.eq.s32.totalorder %s23, 0
      %p138 = por %p136, %p137
      %p139 = scmp.ne.s32.totalorder %s125, %s126
      %p140 = scmp.eq.s32.totalorder %s24, 1
      %p141 = por %p139, %p140
      %p143 = scmp.ne.s32.totalorder %s126, %s142
      %p144 = scmp.eq.s32.totalorder %s24, 0
      %p145 = por %p143, %p144
      %p146 = scmp.le.s32.totalorder 1, %s18
      %p147 = scmp.lt.s32.totalorder %s18, 3
      %p148 = pnand %p146, %p147
      %p149 = pneg %p148
      // Predicated region
      $region9: #{tpu_custom_call.1} parent=5 // pred_check
        _
      $region10: #{tpu_custom_call.1} parent=5 // pred_check_branch
        %151 = sbr.rel (%p148) target = $region12
      $region11: #{tpu_custom_call.1} parent=5 // pred_region
        %s152 = ssub.s32 %s18, 1
      $region12: #{tpu_custom_call.1} parent=5 // pred_fallthru
        _
      %p153 = scmp.lt.s32.totalorder %s18, 2
      // Predicated region
      $region13: #{tpu_custom_call.1} parent=5 // pred_check
        %p154 = pneg %p153
      $region14: #{tpu_custom_call.1} parent=5 // pred_check_branch
        %156 = sbr.rel (%p154) target = $region16
      $region15: #{tpu_custom_call.1} parent=5 // pred_region
        // Predicated region
        $region17: #{tpu_custom_call.1} parent=15 // pred_check
          %p157 = pneg %p52
        $region18: #{tpu_custom_call.1} parent=15 // pred_check_branch
          %159 = sbr.rel (%p157) target = $region20
        $region19: #{tpu_custom_call.1} parent=15 // pred_region
          %s160 = sand.u32 %s42, 1
          %s161 = scalar_lea.sflag [#allocation4], %s160
          %s162 = sand.u32 %s42, 1
          %s163 = smul.addr %s162, 64
          %s164 = scalar_lea.vmem [#allocation3], %s163
          %s165 = smul.u32 4, %s26
          %167 = vsyncadd %s161, 0
          %s168 = smul.addr %s165, 2
          %s169 = smul.addr %s25, 8
          %s170 = sadd.s32 %s168, %s169
          %s171 = smul.addr %s170, 8
          %s172 = scalar_lea.hbm %s0, %s171
          %s173 = sshll.u32 %s172, 4
          %s174 = int_to_ptr.hbm [resolvable:$true] %s173
          %s175 = sshll.u32 %s164, 4
          %s176 = int_to_ptr.vmem [resolvable:$true] %s175
          %181 = dma.hbm_to_vmem [thread:$0]  %s174, 1024, %s176, %s161, 256, 256, 16
        $region20: #{tpu_custom_call.1} parent=15 // pred_fallthru
          _
        // Predicated region
        $region21: #{tpu_custom_call.1} parent=15 // pred_check
          %p182 = pneg %p78
        $region22: #{tpu_custom_call.1} parent=15 // pred_check_branch
          %184 = sbr.rel (%p182) target = $region24
        $region23: #{tpu_custom_call.1} parent=15 // pred_region
          %s185 = sand.u32 %s18, 1
          %s186 = scalar_lea.sflag [#allocation7], %s185
          %s187 = sand.u32 %s68, 1
          %s188 = smul.addr %s187, 16
          %s189 = scalar_lea.vmem [#allocation6], %s188
          %191 = vsyncadd %s186, 0
          %s192 = smul.addr %s25, 2
          %s193 = smul.addr %s192, 8
          %s194 = scalar_lea.hbm %s1, %s193
          %s195 = sshll.u32 %s194, 4
          %s196 = int_to_ptr.hbm [resolvable:$true] %s195
          %s197 = sshll.u32 %s189, 4
          %s198 = int_to_ptr.vmem [resolvable:$true] %s197
          %203 = dma.hbm_to_vmem [thread:$0]  %s196, 256, %s198, %s186, 128, 128, 8
        $region24: #{tpu_custom_call.1} parent=15 // pred_fallthru
          _
        // Predicated region
        $region25: #{tpu_custom_call.1} parent=15 // pred_check
          %p204 = pneg %p104
        $region26: #{tpu_custom_call.1} parent=15 // pred_check_branch
          %206 = sbr.rel (%p204) target = $region28
        $region27: #{tpu_custom_call.1} parent=15 // pred_region
          %s207 = sand.u32 %s18, 1
          %s208 = scalar_lea.sflag [#allocation7], %s207
          %s209 = sand.u32 %s94, 1
          %s210 = smul.addr %s209, 16
          %s211 = scalar_lea.vmem [#allocation8], %s210
          %213 = vsyncadd %s208, 0
          %s214 = smul.addr %s25, 2
          %s215 = smul.addr %s214, 8
          %s216 = scalar_lea.hbm %s2, %s215
          %s217 = sshll.u32 %s216, 4
          %s218 = int_to_ptr.hbm [resolvable:$true] %s217
          %s219 = sshll.u32 %s211, 4
          %s220 = int_to_ptr.vmem [resolvable:$true] %s219
          %225 = dma.hbm_to_vmem [thread:$0]  %s218, 256, %s220, %s208, 128, 128, 8
        $region28: #{tpu_custom_call.1} parent=15 // pred_fallthru
          _
      $region16: #{tpu_custom_call.1} parent=5 // pred_fallthru
        _
      %p226 = scmp.le.s32.totalorder 1, %s18
      %p227 = scmp.lt.s32.totalorder %s18, 3
      %p228 = pnand %p226, %p227
      %p229 = pneg %p228
      // Predicated region
      $region29: #{tpu_custom_call.1} parent=5 // pred_check
        _
      $region30: #{tpu_custom_call.1} parent=5 // pred_check_branch
        %231 = sbr.rel (%p228) target = $region32
      $region31: #{tpu_custom_call.1} parent=5 // pred_region
        %s232 = ssub.s32 %s18, 1
        %s233 = sand.u32 %s45, 1
        %s234 = scalar_lea.sflag [#allocation4], %s233
        %s235 = sand.u32 %s45, 1
        %s236 = smul.addr %s235, 64
        %s237 = scalar_lea.vmem [#allocation3], %s236
        // Predicated region
        $region33: #{tpu_custom_call.1} parent=31 // pred_check
          %p238 = pneg %p58
        $region34: #{tpu_custom_call.1} parent=31 // pred_check_branch
          %240 = sbr.rel (%p238) target = $region36
        $region35: #{tpu_custom_call.1} parent=31 // pred_region
          %242 = dma.done %s234, 1024
        $region36: #{tpu_custom_call.1} parent=31 // pred_fallthru
          _
        %s243 = sand.u32 %s23, 1
        %s244 = scalar_lea.sflag [#allocation7], %s243
        %s245 = sand.u32 %s71, 1
        %s246 = smul.addr %s245, 16
        %s247 = scalar_lea.vmem [#allocation6], %s246
        // Predicated region
        $region37: #{tpu_custom_call.1} parent=31 // pred_check
          %p248 = pneg %p84
        $region38: #{tpu_custom_call.1} parent=31 // pred_check_branch
          %250 = sbr.rel (%p248) target = $region40
        $region39: #{tpu_custom_call.1} parent=31 // pred_region
          %252 = dma.done %s244, 256
        $region40: #{tpu_custom_call.1} parent=31 // pred_fallthru
          _
        %s253 = sand.u32 %s23, 1
        %s254 = scalar_lea.sflag [#allocation7], %s253
        %s255 = sand.u32 %s97, 1
        %s256 = smul.addr %s255, 16
        %s257 = scalar_lea.vmem [#allocation8], %s256
        // Predicated region
        $region41: #{tpu_custom_call.1} parent=31 // pred_check
          %p258 = pneg %p110
        $region42: #{tpu_custom_call.1} parent=31 // pred_check_branch
          %260 = sbr.rel (%p258) target = $region44
        $region43: #{tpu_custom_call.1} parent=31 // pred_region
          %262 = dma.done %s254, 256
        $region44: #{tpu_custom_call.1} parent=31 // pred_fallthru
          _
        %s263 = sand.u32 %s45, 1
        %s264 = scalar_lea.sflag [#allocation4], %s263
        %s265 = sand.u32 %s45, 1
        %s266 = smul.addr %s265, 64
        %s267 = scalar_lea.vmem [#allocation3], %s266
        %p268 = pneg %p58
        %p269 = pneg %p55
        %s270 = sand.u32 %s23, 1
        %s271 = scalar_lea.sflag [#allocation7], %s270
        %s272 = sand.u32 %s71, 1
        %s273 = smul.addr %s272, 16
        %s274 = scalar_lea.vmem [#allocation6], %s273
        %p275 = pneg %p84
        %p276 = pneg %p81
        %s277 = sand.u32 %s23, 1
        %s278 = scalar_lea.sflag [#allocation7], %s277
        %s279 = sand.u32 %s97, 1
        %s280 = smul.addr %s279, 16
        %s281 = scalar_lea.vmem [#allocation8], %s280
        %p282 = pneg %p110
        %p283 = pneg %p107
        %p284 = pneg %p138
        %p285 = pneg %p135
        %s286 = sand.u32 %s125, 1
        %s287 = scalar_lea.sflag [#allocation5], %s286
        %s288 = sand.u32 %s125, 1
        %s289 = smul.addr %s288, 64
        %s290 = scalar_lea.vmem [#allocation9], %s289
        %s291 = smul.u32 4, %s28
        %s292 = smul.u32 4, %s28
        %p293 = scmp.eq.s32.totalorder %s28, 0
        // Predicated region
        $region45: #{tpu_custom_call.1} parent=31 // pred_check
          %p294 = pneg %p293
        $region46: #{tpu_custom_call.1} parent=31 // pred_check_branch
          %296 = sbr.rel (%p294) target = $region48
        $region47: #{tpu_custom_call.1} parent=31 // pred_region
          %v297 = vld [vmem:[%s257] sm:$0xff]
          %v298 = vld [vmem:[%s257 + $0x8] sm:$0xff]
          %v299 = vlaneseq
          %v300 = vshrl.u32 %v299, 7
          %v301 = vadd.s32 %v300, 8
          %v302 = vlaneseq
          %v303 = vand.u32 %v302, 127
          %v304 = vadd.s32 %v303, 128
          %vm305 = vcmp.eq.s32.totalorder %v303, %v300
          %vm306 = vcmp.eq.s32.totalorder %v304, %v300
          %vm307 = vcmp.eq.s32.totalorder %v303, %v301
          %vm308 = vcmp.eq.s32.totalorder %v304, %v301
          %v309 = vsel %vm305, 1, 0
          %v310 = vsel %vm306, 1, 0
          %v311 = vsel %vm307, 1, 0
          %v312 = vsel %vm308, 1, 0
          %v313 = vcvt.s32.f32 %v309
          %v314 = vcvt.s32.f32 %v310
          %v315 = vcvt.s32.f32 %v311
          %v316 = vcvt.s32.f32 %v312
          %vm317 = vcmask 130048
          %v319 = vsel %vm317, %v297, 0
          %v322 = vsel %vm317, %v298, 0
          %324 = vmatpush.msra.mxu0 0.0
          %325 = vmatpush.msra.mxu0 0.0
          %326 = vmatpush.msra.mxu0 0.0
          %327 = vmatpush.msra.mxu0 0.0
          %328 = vmatpush.msra.mxu0 0.0
          %329 = vmatpush.msra.mxu0 0.0
          %330 = vmatpush.msra.mxu0 0.0
          %331 = vmatpush.msra.mxu0 0.0
          %332 = vmatpush.msra.mxu0 0.0
          %333 = vmatpush.msra.mxu0 0.0
          %334 = vmatpush.msra.mxu0 0.0
          %335 = vmatpush.msra.mxu0 0.0
          %336 = vmatpush.msra.mxu0 0.0
          %337 = vmatpush.msra.mxu0 0.0
          %338 = vmatpush.msra.mxu0 %v315
          %339 = vmatpush.msra.mxu0 %v313
          %340 = vmatmul.f32.gmra.mxu0 %v319
          %v341 = vpop.f32.mrf.mxu0
          %v342 = vadd.f32 0.0, %v341
          %343 = vmatmul.f32.gmra.mxu0 %v322
          %v344 = vpop.f32.mrf.mxu0
          %v345 = vadd.f32 0.0, %v344
          %346 = vdwg.mxu0
          %347 = vmatpush.msra.mxu0 0.0
          %348 = vmatpush.msra.mxu0 0.0
          %349 = vmatpush.msra.mxu0 0.0
          %350 = vmatpush.msra.mxu0 0.0
          %351 = vmatpush.msra.mxu0 0.0
          %352 = vmatpush.msra.mxu0 0.0
          %353 = vmatpush.msra.mxu0 0.0
          %354 = vmatpush.msra.mxu0 0.0
          %355 = vmatpush.msra.mxu0 0.0
          %356 = vmatpush.msra.mxu0 0.0
          %357 = vmatpush.msra.mxu0 0.0
          %358 = vmatpush.msra.mxu0 0.0
          %359 = vmatpush.msra.mxu0 0.0
          %360 = vmatpush.msra.mxu0 0.0
          %361 = vmatpush.msra.mxu0 %v316
          %362 = vmatpush.msra.mxu0 %v314
          %363 = vmatmul.f32.gmra.mxu0 %v319
          %v364 = vpop.f32.mrf.mxu0
          %v365 = vadd.f32 0.0, %v364
          %366 = vmatmul.f32.gmra.mxu0 %v322
          %v367 = vpop.f32.mrf.mxu0
          %v368 = vadd.f32 0.0, %v367
          %369 = vdwg.mxu0
          %370 = vst [vmem:[#allocation2] sm:$0xff] %v342
          %371 = vst [vmem:[#allocation2 + $0x8] sm:$0xff] %v365
          %372 = vst [vmem:[#allocation2 + $0x10] sm:$0xff] %v345
          %373 = vst [vmem:[#allocation2 + $0x18] sm:$0xff] %v368
          %v374 = vadd.s32 %v300, 16
          %v375 = vadd.s32 %v301, 16
          %vm376 = vcmp.eq.s32.totalorder %v303, %v374
          %vm377 = vcmp.eq.s32.totalorder %v304, %v374
          %vm378 = vcmp.eq.s32.totalorder %v303, %v375
          %vm379 = vcmp.eq.s32.totalorder %v304, %v375
          %v380 = vsel %vm376, 1, 0
          %v381 = vsel %vm377, 1, 0
          %v382 = vsel %vm378, 1, 0
          %v383 = vsel %vm379, 1, 0
          %v384 = vcvt.s32.f32 %v380
          %v385 = vcvt.s32.f32 %v381
          %v386 = vcvt.s32.f32 %v382
          %v387 = vcvt.s32.f32 %v383
          %388 = vmatpush.msra.mxu0 0.0
          %389 = vmatpush.msra.mxu0 0.0
          %390 = vmatpush.msra.mxu0 0.0
          %391 = vmatpush.msra.mxu0 0.0
          %392 = vmatpush.msra.mxu0 0.0
          %393 = vmatpush.msra.mxu0 0.0
          %394 = vmatpush.msra.mxu0 0.0
          %395 = vmatpush.msra.mxu0 0.0
          %396 = vmatpush.msra.mxu0 0.0
          %397 = vmatpush.msra.mxu0 0.0
          %398 = vmatpush.msra.mxu0 0.0
          %399 = vmatpush.msra.mxu0 0.0
          %400 = vmatpush.msra.mxu0 0.0
          %401 = vmatpush.msra.mxu0 0.0
          %402 = vmatpush.msra.mxu0 %v386
          %403 = vmatpush.msra.mxu0 %v384
          %404 = vmatmul.f32.gmra.mxu0 %v319
          %v405 = vpop.f32.mrf.mxu0
          %v406 = vadd.f32 0.0, %v405
          %407 = vmatmul.f32.gmra.mxu0 %v322
          %v408 = vpop.f32.mrf.mxu0
          %v409 = vadd.f32 0.0, %v408
          %410 = vdwg.mxu0
          %411 = vmatpush.msra.mxu0 0.0
          %412 = vmatpush.msra.mxu0 0.0
          %413 = vmatpush.msra.mxu0 0.0
          %414 = vmatpush.msra.mxu0 0.0
          %415 = vmatpush.msra.mxu0 0.0
          %416 = vmatpush.msra.mxu0 0.0
          %417 = vmatpush.msra.mxu0 0.0
          %418 = vmatpush.msra.mxu0 0.0
          %419 = vmatpush.msra.mxu0 0.0
          %420 = vmatpush.msra.mxu0 0.0
          %421 = vmatpush.msra.mxu0 0.0
          %422 = vmatpush.msra.mxu0 0.0
          %423 = vmatpush.msra.mxu0 0.0
          %424 = vmatpush.msra.mxu0 0.0
          %425 = vmatpush.msra.mxu0 %v387
          %426 = vmatpush.msra.mxu0 %v385
          %427 = vmatmul.f32.gmra.mxu0 %v319
          %v428 = vpop.f32.mrf.mxu0
          %v429 = vadd.f32 0.0, %v428
          %430 = vmatmul.f32.gmra.mxu0 %v322
          %v431 = vpop.f32.mrf.mxu0
          %v432 = vadd.f32 0.0, %v431
          %433 = vdwg.mxu0
          %434 = vst [vmem:[#allocation2 + $0x20] sm:$0xff] %v406
          %435 = vst [vmem:[#allocation2 + $0x28] sm:$0xff] %v429
          %436 = vst [vmem:[#allocation2 + $0x30] sm:$0xff] %v409
          %437 = vst [vmem:[#allocation2 + $0x38] sm:$0xff] %v432
          %v438 = vadd.s32 %v300, 32
          %v439 = vadd.s32 %v301, 32
          %vm440 = vcmp.eq.s32.totalorder %v303, %v438
          %vm441 = vcmp.eq.s32.totalorder %v304, %v438
          %vm442 = vcmp.eq.s32.totalorder %v303, %v439
          %vm443 = vcmp.eq.s32.totalorder %v304, %v439
          %v444 = vsel %vm440, 1, 0
          %v445 = vsel %vm441, 1, 0
          %v446 = vsel %vm442, 1, 0
          %v447 = vsel %vm443, 1, 0
          %v448 = vcvt.s32.f32 %v444
          %v449 = vcvt.s32.f32 %v445
          %v450 = vcvt.s32.f32 %v446
          %v451 = vcvt.s32.f32 %v447
          %452 = vmatpush.msra.mxu0 0.0
          %453 = vmatpush.msra.mxu0 0.0
          %454 = vmatpush.msra.mxu0 0.0
          %455 = vmatpush.msra.mxu0 0.0
          %456 = vmatpush.msra.mxu0 0.0
          %457 = vmatpush.msra.mxu0 0.0
          %458 = vmatpush.msra.mxu0 0.0
          %459 = vmatpush.msra.mxu0 0.0
          %460 = vmatpush.msra.mxu0 0.0
          %461 = vmatpush.msra.mxu0 0.0
          %462 = vmatpush.msra.mxu0 0.0
          %463 = vmatpush.msra.mxu0 0.0
          %464 = vmatpush.msra.mxu0 0.0
          %465 = vmatpush.msra.mxu0 0.0
          %466 = vmatpush.msra.mxu0 %v450
          %467 = vmatpush.msra.mxu0 %v448
          %468 = vmatmul.f32.gmra.mxu0 %v319
          %v469 = vpop.f32.mrf.mxu0
          %v470 = vadd.f32 0.0, %v469
          %471 = vmatmul.f32.gmra.mxu0 %v322
          %v472 = vpop.f32.mrf.mxu0
          %v473 = vadd.f32 0.0, %v472
          %474 = vdwg.mxu0
          %475 = vmatpush.msra.mxu0 0.0
          %476 = vmatpush.msra.mxu0 0.0
          %477 = vmatpush.msra.mxu0 0.0
          %478 = vmatpush.msra.mxu0 0.0
          %479 = vmatpush.msra.mxu0 0.0
          %480 = vmatpush.msra.mxu0 0.0
          %481 = vmatpush.msra.mxu0 0.0
          %482 = vmatpush.msra.mxu0 0.0
          %483 = vmatpush.msra.mxu0 0.0
          %484 = vmatpush.msra.mxu0 0.0
          %485 = vmatpush.msra.mxu0 0.0
          %486 = vmatpush.msra.mxu0 0.0
          %487 = vmatpush.msra.mxu0 0.0
          %488 = vmatpush.msra.mxu0 0.0
          %489 = vmatpush.msra.mxu0 %v451
          %490 = vmatpush.msra.mxu0 %v449
          %491 = vmatmul.f32.gmra.mxu0 %v319
          %v492 = vpop.f32.mrf.mxu0
          %v493 = vadd.f32 0.0, %v492
          %494 = vmatmul.f32.gmra.mxu0 %v322
          %v495 = vpop.f32.mrf.mxu0
          %v496 = vadd.f32 0.0, %v495
          %497 = vdwg.mxu0
          %498 = vst [vmem:[#allocation2 + $0x40] sm:$0xff] %v470
          %499 = vst [vmem:[#allocation2 + $0x48] sm:$0xff] %v493
          %500 = vst [vmem:[#allocation2 + $0x50] sm:$0xff] %v473
          %501 = vst [vmem:[#allocation2 + $0x58] sm:$0xff] %v496
          %v502 = vadd.s32 %v300, 48
          %v503 = vadd.s32 %v301, 48
          %vm504 = vcmp.eq.s32.totalorder %v303, %v502
          %vm505 = vcmp.eq.s32.totalorder %v304, %v502
          %vm506 = vcmp.eq.s32.totalorder %v303, %v503
          %vm507 = vcmp.eq.s32.totalorder %v304, %v503
          %v508 = vsel %vm504, 1, 0
          %v509 = vsel %vm505, 1, 0
          %v510 = vsel %vm506, 1, 0
          %v511 = vsel %vm507, 1, 0
          %v512 = vcvt.s32.f32 %v508
          %v513 = vcvt.s32.f32 %v509
          %v514 = vcvt.s32.f32 %v510
          %v515 = vcvt.s32.f32 %v511
          %516 = vmatpush.msra.mxu0 0.0
          %517 = vmatpush.msra.mxu0 0.0
          %518 = vmatpush.msra.mxu0 0.0
          %519 = vmatpush.msra.mxu0 0.0
          %520 = vmatpush.msra.mxu0 0.0
          %521 = vmatpush.msra.mxu0 0.0
          %522 = vmatpush.msra.mxu0 0.0
          %523 = vmatpush.msra.mxu0 0.0
          %524 = vmatpush.msra.mxu0 0.0
          %525 = vmatpush.msra.mxu0 0.0
          %526 = vmatpush.msra.mxu0 0.0
          %527 = vmatpush.msra.mxu0 0.0
          %528 = vmatpush.msra.mxu0 0.0
          %529 = vmatpush.msra.mxu0 0.0
          %530 = vmatpush.msra.mxu0 %v514
          %531 = vmatpush.msra.mxu0 %v512
          %532 = vmatmul.f32.gmra.mxu0 %v319
          %v533 = vpop.f32.mrf.mxu0
          %v534 = vadd.f32 0.0, %v533
          %535 = vmatmul.f32.gmra.mxu0 %v322
          %v536 = vpop.f32.mrf.mxu0
          %v537 = vadd.f32 0.0, %v536
          %538 = vdwg.mxu0
          %539 = vmatpush.msra.mxu0 0.0
          %540 = vmatpush.msra.mxu0 0.0
          %541 = vmatpush.msra.mxu0 0.0
          %542 = vmatpush.msra.mxu0 0.0
          %543 = vmatpush.msra.mxu0 0.0
          %544 = vmatpush.msra.mxu0 0.0
          %545 = vmatpush.msra.mxu0 0.0
          %546 = vmatpush.msra.mxu0 0.0
          %547 = vmatpush.msra.mxu0 0.0
          %548 = vmatpush.msra.mxu0 0.0
          %549 = vmatpush.msra.mxu0 0.0
          %550 = vmatpush.msra.mxu0 0.0
          %551 = vmatpush.msra.mxu0 0.0
          %552 = vmatpush.msra.mxu0 0.0
          %553 = vmatpush.msra.mxu0 %v515
          %554 = vmatpush.msra.mxu0 %v513
          %555 = vmatmul.f32.gmra.mxu0 %v319
          %v556 = vpop.f32.mrf.mxu0
          %v557 = vadd.f32 0.0, %v556
          %558 = vmatmul.f32.gmra.mxu0 %v322
          %v559 = vpop.f32.mrf.mxu0
          %v560 = vadd.f32 0.0, %v559
          %561 = vdwg.mxu0
          %562 = vst [vmem:[#allocation2 + $0x60] sm:$0xff] %v534
          %563 = vst [vmem:[#allocation2 + $0x68] sm:$0xff] %v557
          %564 = vst [vmem:[#allocation2 + $0x70] sm:$0xff] %v537
          %565 = vst [vmem:[#allocation2 + $0x78] sm:$0xff] %v560
          %v566 = vadd.s32 %v300, 64
          %v567 = vadd.s32 %v301, 64
          %vm568 = vcmp.eq.s32.totalorder %v303, %v566
          %vm569 = vcmp.eq.s32.totalorder %v304, %v566
          %vm570 = vcmp.eq.s32.totalorder %v303, %v567
          %vm571 = vcmp.eq.s32.totalorder %v304, %v567
          %v572 = vsel %vm568, 1, 0
          %v573 = vsel %vm569, 1, 0
          %v574 = vsel %vm570, 1, 0
          %v575 = vsel %vm571, 1, 0
          %v576 = vcvt.s32.f32 %v572
          %v577 = vcvt.s32.f32 %v573
          %v578 = vcvt.s32.f32 %v574
          %v579 = vcvt.s32.f32 %v575
          %580 = vmatpush.msra.mxu0 0.0
          %581 = vmatpush.msra.mxu0 0.0
          %582 = vmatpush.msra.mxu0 0.0
          %583 = vmatpush.msra.mxu0 0.0
          %584 = vmatpush.msra.mxu0 0.0
          %585 = vmatpush.msra.mxu0 0.0
          %586 = vmatpush.msra.mxu0 0.0
          %587 = vmatpush.msra.mxu0 0.0
          %588 = vmatpush.msra.mxu0 0.0
          %589 = vmatpush.msra.mxu0 0.0
          %590 = vmatpush.msra.mxu0 0.0
          %591 = vmatpush.msra.mxu0 0.0
          %592 = vmatpush.msra.mxu0 0.0
          %593 = vmatpush.msra.mxu0 0.0
          %594 = vmatpush.msra.mxu0 %v578
          %595 = vmatpush.msra.mxu0 %v576
          %596 = vmatmul.f32.gmra.mxu0 %v319
          %v597 = vpop.f32.mrf.mxu0
          %v598 = vadd.f32 0.0, %v597
          %599 = vmatmul.f32.gmra.mxu0 %v322
          %v600 = vpop.f32.mrf.mxu0
          %v601 = vadd.f32 0.0, %v600
          %602 = vdwg.mxu0
          %603 = vmatpush.msra.mxu0 0.0
          %604 = vmatpush.msra.mxu0 0.0
          %605 = vmatpush.msra.mxu0 0.0
          %606 = vmatpush.msra.mxu0 0.0
          %607 = vmatpush.msra.mxu0 0.0
          %608 = vmatpush.msra.mxu0 0.0
          %609 = vmatpush.msra.mxu0 0.0
          %610 = vmatpush.msra.mxu0 0.0
          %611 = vmatpush.msra.mxu0 0.0
          %612 = vmatpush.msra.mxu0 0.0
          %613 = vmatpush.msra.mxu0 0.0
          %614 = vmatpush.msra.mxu0 0.0
          %615 = vmatpush.msra.mxu0 0.0
          %616 = vmatpush.msra.mxu0 0.0
          %617 = vmatpush.msra.mxu0 %v579
          %618 = vmatpush.msra.mxu0 %v577
          %619 = vmatmul.f32.gmra.mxu0 %v319
          %v620 = vpop.f32.mrf.mxu0
          %v621 = vadd.f32 0.0, %v620
          %622 = vmatmul.f32.gmra.mxu0 %v322
          %v623 = vpop.f32.mrf.mxu0
          %v624 = vadd.f32 0.0, %v623
          %625 = vdwg.mxu0
          %626 = vst [vmem:[#allocation2 + $0x80] sm:$0xff] %v598
          %627 = vst [vmem:[#allocation2 + $0x88] sm:$0xff] %v621
          %628 = vst [vmem:[#allocation2 + $0x90] sm:$0xff] %v601
          %629 = vst [vmem:[#allocation2 + $0x98] sm:$0xff] %v624
          %v630 = vadd.s32 %v300, 80
          %v631 = vadd.s32 %v301, 80
          %vm632 = vcmp.eq.s32.totalorder %v303, %v630
          %vm633 = vcmp.eq.s32.totalorder %v304, %v630
          %vm634 = vcmp.eq.s32.totalorder %v303, %v631
          %vm635 = vcmp.eq.s32.totalorder %v304, %v631
          %v636 = vsel %vm632, 1, 0
          %v637 = vsel %vm633, 1, 0
          %v638 = vsel %vm634, 1, 0
          %v639 = vsel %vm635, 1, 0
          %v640 = vcvt.s32.f32 %v636
          %v641 = vcvt.s32.f32 %v637
          %v642 = vcvt.s32.f32 %v638
          %v643 = vcvt.s32.f32 %v639
          %644 = vmatpush.msra.mxu0 0.0
          %645 = vmatpush.msra.mxu0 0.0
          %646 = vmatpush.msra.mxu0 0.0
          %647 = vmatpush.msra.mxu0 0.0
          %648 = vmatpush.msra.mxu0 0.0
          %649 = vmatpush.msra.mxu0 0.0
          %650 = vmatpush.msra.mxu0 0.0
          %651 = vmatpush.msra.mxu0 0.0
          %652 = vmatpush.msra.mxu0 0.0
          %653 = vmatpush.msra.mxu0 0.0
          %654 = vmatpush.msra.mxu0 0.0
          %655 = vmatpush.msra.mxu0 0.0
          %656 = vmatpush.msra.mxu0 0.0
          %657 = vmatpush.msra.mxu0 0.0
          %658 = vmatpush.msra.mxu0 %v642
          %659 = vmatpush.msra.mxu0 %v640
          %660 = vmatmul.f32.gmra.mxu0 %v319
          %v661 = vpop.f32.mrf.mxu0
          %v662 = vadd.f32 0.0, %v661
          %663 = vmatmul.f32.gmra.mxu0 %v322
          %v664 = vpop.f32.mrf.mxu0
          %v665 = vadd.f32 0.0, %v664
          %666 = vdwg.mxu0
          %667 = vmatpush.msra.mxu0 0.0
          %668 = vmatpush.msra.mxu0 0.0
          %669 = vmatpush.msra.mxu0 0.0
          %670 = vmatpush.msra.mxu0 0.0
          %671 = vmatpush.msra.mxu0 0.0
          %672 = vmatpush.msra.mxu0 0.0
          %673 = vmatpush.msra.mxu0 0.0
          %674 = vmatpush.msra.mxu0 0.0
          %675 = vmatpush.msra.mxu0 0.0
          %676 = vmatpush.msra.mxu0 0.0
          %677 = vmatpush.msra.mxu0 0.0
          %678 = vmatpush.msra.mxu0 0.0
          %679 = vmatpush.msra.mxu0 0.0
          %680 = vmatpush.msra.mxu0 0.0
          %681 = vmatpush.msra.mxu0 %v643
          %682 = vmatpush.msra.mxu0 %v641
          %683 = vmatmul.f32.gmra.mxu0 %v319
          %v684 = vpop.f32.mrf.mxu0
          %v685 = vadd.f32 0.0, %v684
          %686 = vmatmul.f32.gmra.mxu0 %v322
          %v687 = vpop.f32.mrf.mxu0
          %v688 = vadd.f32 0.0, %v687
          %689 = vdwg.mxu0
          %690 = vst [vmem:[#allocation2 + $0xa0] sm:$0xff] %v662
          %691 = vst [vmem:[#allocation2 + $0xa8] sm:$0xff] %v685
          %692 = vst [vmem:[#allocation2 + $0xb0] sm:$0xff] %v665
          %693 = vst [vmem:[#allocation2 + $0xb8] sm:$0xff] %v688
          %v694 = vadd.s32 %v300, 96
          %v695 = vadd.s32 %v301, 96
          %vm696 = vcmp.eq.s32.totalorder %v303, %v694
          %vm697 = vcmp.eq.s32.totalorder %v304, %v694
          %vm698 = vcmp.eq.s32.totalorder %v303, %v695
          %vm699 = vcmp.eq.s32.totalorder %v304, %v695
          %v700 = vsel %vm696, 1, 0
          %v701 = vsel %vm697, 1, 0
          %v702 = vsel %vm698, 1, 0
          %v703 = vsel %vm699, 1, 0
          %v704 = vcvt.s32.f32 %v700
          %v705 = vcvt.s32.f32 %v701
          %v706 = vcvt.s32.f32 %v702
          %v707 = vcvt.s32.f32 %v703
          %708 = vmatpush.msra.mxu0 0.0
          %709 = vmatpush.msra.mxu0 0.0
          %710 = vmatpush.msra.mxu0 0.0
          %711 = vmatpush.msra.mxu0 0.0
          %712 = vmatpush.msra.mxu0 0.0
          %713 = vmatpush.msra.mxu0 0.0
          %714 = vmatpush.msra.mxu0 0.0
          %715 = vmatpush.msra.mxu0 0.0
          %716 = vmatpush.msra.mxu0 0.0
          %717 = vmatpush.msra.mxu0 0.0
          %718 = vmatpush.msra.mxu0 0.0
          %719 = vmatpush.msra.mxu0 0.0
          %720 = vmatpush.msra.mxu0 0.0
          %721 = vmatpush.msra.mxu0 0.0
          %722 = vmatpush.msra.mxu0 %v706
          %723 = vmatpush.msra.mxu0 %v704
          %724 = vmatmul.f32.gmra.mxu0 %v319
          %v725 = vpop.f32.mrf.mxu0
          %v726 = vadd.f32 0.0, %v725
          %727 = vmatmul.f32.gmra.mxu0 %v322
          %v728 = vpop.f32.mrf.mxu0
          %v729 = vadd.f32 0.0, %v728
          %730 = vdwg.mxu0
          %731 = vmatpush.msra.mxu0 0.0
          %732 = vmatpush.msra.mxu0 0.0
          %733 = vmatpush.msra.mxu0 0.0
          %734 = vmatpush.msra.mxu0 0.0
          %735 = vmatpush.msra.mxu0 0.0
          %736 = vmatpush.msra.mxu0 0.0
          %737 = vmatpush.msra.mxu0 0.0
          %738 = vmatpush.msra.mxu0 0.0
          %739 = vmatpush.msra.mxu0 0.0
          %740 = vmatpush.msra.mxu0 0.0
          %741 = vmatpush.msra.mxu0 0.0
          %742 = vmatpush.msra.mxu0 0.0
          %743 = vmatpush.msra.mxu0 0.0
          %744 = vmatpush.msra.mxu0 0.0
          %745 = vmatpush.msra.mxu0 %v707
          %746 = vmatpush.msra.mxu0 %v705
          %747 = vmatmul.f32.gmra.mxu0 %v319
          %v748 = vpop.f32.mrf.mxu0
          %v749 = vadd.f32 0.0, %v748
          %750 = vmatmul.f32.gmra.mxu0 %v322
          %v751 = vpop.f32.mrf.mxu0
          %v752 = vadd.f32 0.0, %v751
          %753 = vdwg.mxu0
          %754 = vst [vmem:[#allocation2 + $0xc0] sm:$0xff] %v726
          %755 = vst [vmem:[#allocation2 + $0xc8] sm:$0xff] %v749
          %756 = vst [vmem:[#allocation2 + $0xd0] sm:$0xff] %v729
          %757 = vst [vmem:[#allocation2 + $0xd8] sm:$0xff] %v752
          %v758 = vadd.s32 %v300, 112
          %v759 = vadd.s32 %v301, 112
          %vm760 = vcmp.eq.s32.totalorder %v303, %v758
          %vm761 = vcmp.eq.s32.totalorder %v304, %v758
          %vm762 = vcmp.eq.s32.totalorder %v303, %v759
          %vm763 = vcmp.eq.s32.totalorder %v304, %v759
          %v764 = vsel %vm760, 1, 0
          %v765 = vsel %vm761, 1, 0
          %v766 = vsel %vm762, 1, 0
          %v767 = vsel %vm763, 1, 0
          %v768 = vcvt.s32.f32 %v764
          %v769 = vcvt.s32.f32 %v765
          %v770 = vcvt.s32.f32 %v766
          %v771 = vcvt.s32.f32 %v767
          %772 = vmatpush.msra.mxu0 0.0
          %773 = vmatpush.msra.mxu0 0.0
          %774 = vmatpush.msra.mxu0 0.0
          %775 = vmatpush.msra.mxu0 0.0
          %776 = vmatpush.msra.mxu0 0.0
          %777 = vmatpush.msra.mxu0 0.0
          %778 = vmatpush.msra.mxu0 0.0
          %779 = vmatpush.msra.mxu0 0.0
          %780 = vmatpush.msra.mxu0 0.0
          %781 = vmatpush.msra.mxu0 0.0
          %782 = vmatpush.msra.mxu0 0.0
          %783 = vmatpush.msra.mxu0 0.0
          %784 = vmatpush.msra.mxu0 0.0
          %785 = vmatpush.msra.mxu0 0.0
          %786 = vmatpush.msra.mxu0 %v770
          %787 = vmatpush.msra.mxu0 %v768
          %788 = vmatmul.f32.gmra.mxu0 %v319
          %v789 = vpop.f32.mrf.mxu0
          %v790 = vadd.f32 0.0, %v789
          %791 = vmatmul.f32.gmra.mxu0 %v322
          %v792 = vpop.f32.mrf.mxu0
          %v793 = vadd.f32 0.0, %v792
          %794 = vdwg.mxu0
          %795 = vmatpush.msra.mxu0 0.0
          %796 = vmatpush.msra.mxu0 0.0
          %797 = vmatpush.msra.mxu0 0.0
          %798 = vmatpush.msra.mxu0 0.0
          %799 = vmatpush.msra.mxu0 0.0
          %800 = vmatpush.msra.mxu0 0.0
          %801 = vmatpush.msra.mxu0 0.0
          %802 = vmatpush.msra.mxu0 0.0
          %803 = vmatpush.msra.mxu0 0.0
          %804 = vmatpush.msra.mxu0 0.0
          %805 = vmatpush.msra.mxu0 0.0
          %806 = vmatpush.msra.mxu0 0.0
          %807 = vmatpush.msra.mxu0 0.0
          %808 = vmatpush.msra.mxu0 0.0
          %809 = vmatpush.msra.mxu0 %v771
          %810 = vmatpush.msra.mxu0 %v769
          %811 = vmatmul.f32.gmra.mxu0 %v319
          %v812 = vpop.f32.mrf.mxu0
          %v813 = vadd.f32 0.0, %v812
          %814 = vmatmul.f32.gmra.mxu0 %v322
          %v815 = vpop.f32.mrf.mxu0
          %v816 = vadd.f32 0.0, %v815
          %817 = vdwg.mxu0
          %818 = vst [vmem:[#allocation2 + $0xe0] sm:$0xff] %v790
          %819 = vst [vmem:[#allocation2 + $0xe8] sm:$0xff] %v813
          %820 = vst [vmem:[#allocation2 + $0xf0] sm:$0xff] %v793
          %821 = vst [vmem:[#allocation2 + $0xf8] sm:$0xff] %v816
          %v822 = vadd.s32 %v300, 128
          %v823 = vadd.s32 %v301, 128
          %vm824 = vcmp.eq.s32.totalorder %v303, %v822
          %vm825 = vcmp.eq.s32.totalorder %v304, %v822
          %vm826 = vcmp.eq.s32.totalorder %v303, %v823
          %vm827 = vcmp.eq.s32.totalorder %v304, %v823
          %v828 = vsel %vm824, 1, 0
          %v829 = vsel %vm825, 1, 0
          %v830 = vsel %vm826, 1, 0
          %v831 = vsel %vm827, 1, 0
          %v832 = vcvt.s32.f32 %v828
          %v833 = vcvt.s32.f32 %v829
          %v834 = vcvt.s32.f32 %v830
          %v835 = vcvt.s32.f32 %v831
          %836 = vmatpush.msra.mxu0 0.0
          %837 = vmatpush.msra.mxu0 0.0
          %838 = vmatpush.msra.mxu0 0.0
          %839 = vmatpush.msra.mxu0 0.0
          %840 = vmatpush.msra.mxu0 0.0
          %841 = vmatpush.msra.mxu0 0.0
          %842 = vmatpush.msra.mxu0 0.0
          %843 = vmatpush.msra.mxu0 0.0
          %844 = vmatpush.msra.mxu0 0.0
          %845 = vmatpush.msra.mxu0 0.0
          %846 = vmatpush.msra.mxu0 0.0
          %847 = vmatpush.msra.mxu0 0.0
          %848 = vmatpush.msra.mxu0 0.0
          %849 = vmatpush.msra.mxu0 0.0
          %850 = vmatpush.msra.mxu0 %v834
          %851 = vmatpush.msra.mxu0 %v832
          %852 = vmatmul.f32.gmra.mxu0 %v319
          %v853 = vpop.f32.mrf.mxu0
          %v854 = vadd.f32 0.0, %v853
          %855 = vmatmul.f32.gmra.mxu0 %v322
          %v856 = vpop.f32.mrf.mxu0
          %v857 = vadd.f32 0.0, %v856
          %858 = vdwg.mxu0
          %859 = vmatpush.msra.mxu0 0.0
          %860 = vmatpush.msra.mxu0 0.0
          %861 = vmatpush.msra.mxu0 0.0
          %862 = vmatpush.msra.mxu0 0.0
          %863 = vmatpush.msra.mxu0 0.0
          %864 = vmatpush.msra.mxu0 0.0
          %865 = vmatpush.msra.mxu0 0.0
          %866 = vmatpush.msra.mxu0 0.0
          %867 = vmatpush.msra.mxu0 0.0
          %868 = vmatpush.msra.mxu0 0.0
          %869 = vmatpush.msra.mxu0 0.0
          %870 = vmatpush.msra.mxu0 0.0
          %871 = vmatpush.msra.mxu0 0.0
          %872 = vmatpush.msra.mxu0 0.0
          %873 = vmatpush.msra.mxu0 %v835
          %874 = vmatpush.msra.mxu0 %v833
          %875 = vmatmul.f32.gmra.mxu0 %v319
          %v876 = vpop.f32.mrf.mxu0
          %v877 = vadd.f32 0.0, %v876
          %878 = vmatmul.f32.gmra.mxu0 %v322
          %v879 = vpop.f32.mrf.mxu0
          %v880 = vadd.f32 0.0, %v879
          %881 = vdwg.mxu0
          %882 = vst [vmem:[#allocation2 + $0x100] sm:$0xff] %v854
          %883 = vst [vmem:[#allocation2 + $0x108] sm:$0xff] %v877
          %884 = vst [vmem:[#allocation2 + $0x110] sm:$0xff] %v857
          %885 = vst [vmem:[#allocation2 + $0x118] sm:$0xff] %v880
          %v886 = vadd.s32 %v300, 144
          %v887 = vadd.s32 %v301, 144
          %vm888 = vcmp.eq.s32.totalorder %v303, %v886
          %vm889 = vcmp.eq.s32.totalorder %v304, %v886
          %vm890 = vcmp.eq.s32.totalorder %v303, %v887
          %vm891 = vcmp.eq.s32.totalorder %v304, %v887
          %v892 = vsel %vm888, 1, 0
          %v893 = vsel %vm889, 1, 0
          %v894 = vsel %vm890, 1, 0
          %v895 = vsel %vm891, 1, 0
          %v896 = vcvt.s32.f32 %v892
          %v897 = vcvt.s32.f32 %v893
          %v898 = vcvt.s32.f32 %v894
          %v899 = vcvt.s32.f32 %v895
          %900 = vmatpush.msra.mxu0 0.0
          %901 = vmatpush.msra.mxu0 0.0
          %902 = vmatpush.msra.mxu0 0.0
          %903 = vmatpush.msra.mxu0 0.0
          %904 = vmatpush.msra.mxu0 0.0
          %905 = vmatpush.msra.mxu0 0.0
          %906 = vmatpush.msra.mxu0 0.0
          %907 = vmatpush.msra.mxu0 0.0
          %908 = vmatpush.msra.mxu0 0.0
          %909 = vmatpush.msra.mxu0 0.0
          %910 = vmatpush.msra.mxu0 0.0
          %911 = vmatpush.msra.mxu0 0.0
          %912 = vmatpush.msra.mxu0 0.0
          %913 = vmatpush.msra.mxu0 0.0
          %914 = vmatpush.msra.mxu0 %v898
          %915 = vmatpush.msra.mxu0 %v896
          %916 = vmatmul.f32.gmra.mxu0 %v319
          %v917 = vpop.f32.mrf.mxu0
          %v918 = vadd.f32 0.0, %v917
          %919 = vmatmul.f32.gmra.mxu0 %v322
          %v920 = vpop.f32.mrf.mxu0
          %v921 = vadd.f32 0.0, %v920
          %922 = vdwg.mxu0
          %923 = vmatpush.msra.mxu0 0.0
          %924 = vmatpush.msra.mxu0 0.0
          %925 = vmatpush.msra.mxu0 0.0
          %926 = vmatpush.msra.mxu0 0.0
          %927 = vmatpush.msra.mxu0 0.0
          %928 = vmatpush.msra.mxu0 0.0
          %929 = vmatpush.msra.mxu0 0.0
          %930 = vmatpush.msra.mxu0 0.0
          %931 = vmatpush.msra.mxu0 0.0
          %932 = vmatpush.msra.mxu0 0.0
          %933 = vmatpush.msra.mxu0 0.0
          %934 = vmatpush.msra.mxu0 0.0
          %935 = vmatpush.msra.mxu0 0.0
          %936 = vmatpush.msra.mxu0 0.0
          %937 = vmatpush.msra.mxu0 %v899
          %938 = vmatpush.msra.mxu0 %v897
          %939 = vmatmul.f32.gmra.mxu0 %v319
          %v940 = vpop.f32.mrf.mxu0
          %v941 = vadd.f32 0.0, %v940
          %942 = vmatmul.f32.gmra.mxu0 %v322
          %v943 = vpop.f32.mrf.mxu0
          %v944 = vadd.f32 0.0, %v943
          %945 = vdwg.mxu0
          %946 = vst [vmem:[#allocation2 + $0x120] sm:$0xff] %v918
          %947 = vst [vmem:[#allocation2 + $0x128] sm:$0xff] %v941
          %948 = vst [vmem:[#allocation2 + $0x130] sm:$0xff] %v921
          %949 = vst [vmem:[#allocation2 + $0x138] sm:$0xff] %v944
          %v950 = vadd.s32 %v300, 160
          %v951 = vadd.s32 %v301, 160
          %vm952 = vcmp.eq.s32.totalorder %v303, %v950
          %vm953 = vcmp.eq.s32.totalorder %v304, %v950
          %vm954 = vcmp.eq.s32.totalorder %v303, %v951
          %vm955 = vcmp.eq.s32.totalorder %v304, %v951
          %v956 = vsel %vm952, 1, 0
          %v957 = vsel %vm953, 1, 0
          %v958 = vsel %vm954, 1, 0
          %v959 = vsel %vm955, 1, 0
          %v960 = vcvt.s32.f32 %v956
          %v961 = vcvt.s32.f32 %v957
          %v962 = vcvt.s32.f32 %v958
          %v963 = vcvt.s32.f32 %v959
          %964 = vmatpush.msra.mxu0 0.0
          %965 = vmatpush.msra.mxu0 0.0
          %966 = vmatpush.msra.mxu0 0.0
          %967 = vmatpush.msra.mxu0 0.0
          %968 = vmatpush.msra.mxu0 0.0
          %969 = vmatpush.msra.mxu0 0.0
          %970 = vmatpush.msra.mxu0 0.0
          %971 = vmatpush.msra.mxu0 0.0
          %972 = vmatpush.msra.mxu0 0.0
          %973 = vmatpush.msra.mxu0 0.0
          %974 = vmatpush.msra.mxu0 0.0
          %975 = vmatpush.msra.mxu0 0.0
          %976 = vmatpush.msra.mxu0 0.0
          %977 = vmatpush.msra.mxu0 0.0
          %978 = vmatpush.msra.mxu0 %v962
          %979 = vmatpush.msra.mxu0 %v960
          %980 = vmatmul.f32.gmra.mxu0 %v319
          %v981 = vpop.f32.mrf.mxu0
          %v982 = vadd.f32 0.0, %v981
          %983 = vmatmul.f32.gmra.mxu0 %v322
          %v984 = vpop.f32.mrf.mxu0
          %v985 = vadd.f32 0.0, %v984
          %986 = vdwg.mxu0
          %987 = vmatpush.msra.mxu0 0.0
          %988 = vmatpush.msra.mxu0 0.0
          %989 = vmatpush.msra.mxu0 0.0
          %990 = vmatpush.msra.mxu0 0.0
          %991 = vmatpush.msra.mxu0 0.0
          %992 = vmatpush.msra.mxu0 0.0
          %993 = vmatpush.msra.mxu0 0.0
          %994 = vmatpush.msra.mxu0 0.0
          %995 = vmatpush.msra.mxu0 0.0
          %996 = vmatpush.msra.mxu0 0.0
          %997 = vmatpush.msra.mxu0 0.0
          %998 = vmatpush.msra.mxu0 0.0
          %999 = vmatpush.msra.mxu0 0.0
          %1000 = vmatpush.msra.mxu0 0.0
          %1001 = vmatpush.msra.mxu0 %v963
          %1002 = vmatpush.msra.mxu0 %v961
          %1003 = vmatmul.f32.gmra.mxu0 %v319
          %v1004 = vpop.f32.mrf.mxu0
          %v1005 = vadd.f32 0.0, %v1004
          %1006 = vmatmul.f32.gmra.mxu0 %v322
          %v1007 = vpop.f32.mrf.mxu0
          %v1008 = vadd.f32 0.0, %v1007
          %1009 = vdwg.mxu0
          %1010 = vst [vmem:[#allocation2 + $0x140] sm:$0xff] %v982
          %1011 = vst [vmem:[#allocation2 + $0x148] sm:$0xff] %v1005
          %1012 = vst [vmem:[#allocation2 + $0x150] sm:$0xff] %v985
          %1013 = vst [vmem:[#allocation2 + $0x158] sm:$0xff] %v1008
          %v1014 = vadd.s32 %v300, 176
          %v1015 = vadd.s32 %v301, 176
          %vm1016 = vcmp.eq.s32.totalorder %v303, %v1014
          %vm1017 = vcmp.eq.s32.totalorder %v304, %v1014
          %vm1018 = vcmp.eq.s32.totalorder %v303, %v1015
          %vm1019 = vcmp.eq.s32.totalorder %v304, %v1015
          %v1020 = vsel %vm1016, 1, 0
          %v1021 = vsel %vm1017, 1, 0
          %v1022 = vsel %vm1018, 1, 0
          %v1023 = vsel %vm1019, 1, 0
          %v1024 = vcvt.s32.f32 %v1020
          %v1025 = vcvt.s32.f32 %v1021
          %v1026 = vcvt.s32.f32 %v1022
          %v1027 = vcvt.s32.f32 %v1023
          %1028 = vmatpush.msra.mxu0 0.0
          %1029 = vmatpush.msra.mxu0 0.0
          %1030 = vmatpush.msra.mxu0 0.0
          %1031 = vmatpush.msra.mxu0 0.0
          %1032 = vmatpush.msra.mxu0 0.0
          %1033 = vmatpush.msra.mxu0 0.0
          %1034 = vmatpush.msra.mxu0 0.0
          %1035 = vmatpush.msra.mxu0 0.0
          %1036 = vmatpush.msra.mxu0 0.0
          %1037 = vmatpush.msra.mxu0 0.0
          %1038 = vmatpush.msra.mxu0 0.0
          %1039 = vmatpush.msra.mxu0 0.0
          %1040 = vmatpush.msra.mxu0 0.0
          %1041 = vmatpush.msra.mxu0 0.0
          %1042 = vmatpush.msra.mxu0 %v1026
          %1043 = vmatpush.msra.mxu0 %v1024
          %1044 = vmatmul.f32.gmra.mxu0 %v319
          %v1045 = vpop.f32.mrf.mxu0
          %v1046 = vadd.f32 0.0, %v1045
          %1047 = vmatmul.f32.gmra.mxu0 %v322
          %v1048 = vpop.f32.mrf.mxu0
          %v1049 = vadd.f32 0.0, %v1048
          %1050 = vdwg.mxu0
          %1051 = vmatpush.msra.mxu0 0.0
          %1052 = vmatpush.msra.mxu0 0.0
          %1053 = vmatpush.msra.mxu0 0.0
          %1054 = vmatpush.msra.mxu0 0.0
          %1055 = vmatpush.msra.mxu0 0.0
          %1056 = vmatpush.msra.mxu0 0.0
          %1057 = vmatpush.msra.mxu0 0.0
          %1058 = vmatpush.msra.mxu0 0.0
          %1059 = vmatpush.msra.mxu0 0.0
          %1060 = vmatpush.msra.mxu0 0.0
          %1061 = vmatpush.msra.mxu0 0.0
          %1062 = vmatpush.msra.mxu0 0.0
          %1063 = vmatpush.msra.mxu0 0.0
          %1064 = vmatpush.msra.mxu0 0.0
          %1065 = vmatpush.msra.mxu0 %v1027
          %1066 = vmatpush.msra.mxu0 %v1025
          %1067 = vmatmul.f32.gmra.mxu0 %v319
          %v1068 = vpop.f32.mrf.mxu0
          %v1069 = vadd.f32 0.0, %v1068
          %1070 = vmatmul.f32.gmra.mxu0 %v322
          %v1071 = vpop.f32.mrf.mxu0
          %v1072 = vadd.f32 0.0, %v1071
          %1073 = vdwg.mxu0
          %1074 = vst [vmem:[#allocation2 + $0x160] sm:$0xff] %v1046
          %1075 = vst [vmem:[#allocation2 + $0x168] sm:$0xff] %v1069
          %1076 = vst [vmem:[#allocation2 + $0x170] sm:$0xff] %v1049
          %1077 = vst [vmem:[#allocation2 + $0x178] sm:$0xff] %v1072
          %v1078 = vadd.s32 %v300, 192
          %v1079 = vadd.s32 %v301, 192
          %vm1080 = vcmp.eq.s32.totalorder %v303, %v1078
          %vm1081 = vcmp.eq.s32.totalorder %v304, %v1078
          %vm1082 = vcmp.eq.s32.totalorder %v303, %v1079
          %vm1083 = vcmp.eq.s32.totalorder %v304, %v1079
          %v1084 = vsel %vm1080, 1, 0
          %v1085 = vsel %vm1081, 1, 0
          %v1086 = vsel %vm1082, 1, 0
          %v1087 = vsel %vm1083, 1, 0
          %v1088 = vcvt.s32.f32 %v1084
          %v1089 = vcvt.s32.f32 %v1085
          %v1090 = vcvt.s32.f32 %v1086
          %v1091 = vcvt.s32.f32 %v1087
          %1092 = vmatpush.msra.mxu0 0.0
          %1093 = vmatpush.msra.mxu0 0.0
          %1094 = vmatpush.msra.mxu0 0.0
          %1095 = vmatpush.msra.mxu0 0.0
          %1096 = vmatpush.msra.mxu0 0.0
          %1097 = vmatpush.msra.mxu0 0.0
          %1098 = vmatpush.msra.mxu0 0.0
          %1099 = vmatpush.msra.mxu0 0.0
          %1100 = vmatpush.msra.mxu0 0.0
          %1101 = vmatpush.msra.mxu0 0.0
          %1102 = vmatpush.msra.mxu0 0.0
          %1103 = vmatpush.msra.mxu0 0.0
          %1104 = vmatpush.msra.mxu0 0.0
          %1105 = vmatpush.msra.mxu0 0.0
          %1106 = vmatpush.msra.mxu0 %v1090
          %1107 = vmatpush.msra.mxu0 %v1088
          %1108 = vmatmul.f32.gmra.mxu0 %v319
          %v1109 = vpop.f32.mrf.mxu0
          %v1110 = vadd.f32 0.0, %v1109
          %1111 = vmatmul.f32.gmra.mxu0 %v322
          %v1112 = vpop.f32.mrf.mxu0
          %v1113 = vadd.f32 0.0, %v1112
          %1114 = vdwg.mxu0
          %1115 = vmatpush.msra.mxu0 0.0
          %1116 = vmatpush.msra.mxu0 0.0
          %1117 = vmatpush.msra.mxu0 0.0
          %1118 = vmatpush.msra.mxu0 0.0
          %1119 = vmatpush.msra.mxu0 0.0
          %1120 = vmatpush.msra.mxu0 0.0
          %1121 = vmatpush.msra.mxu0 0.0
          %1122 = vmatpush.msra.mxu0 0.0
          %1123 = vmatpush.msra.mxu0 0.0
          %1124 = vmatpush.msra.mxu0 0.0
          %1125 = vmatpush.msra.mxu0 0.0
          %1126 = vmatpush.msra.mxu0 0.0
          %1127 = vmatpush.msra.mxu0 0.0
          %1128 = vmatpush.msra.mxu0 0.0
          %1129 = vmatpush.msra.mxu0 %v1091
          %1130 = vmatpush.msra.mxu0 %v1089
          %1131 = vmatmul.f32.gmra.mxu0 %v319
          %v1132 = vpop.f32.mrf.mxu0
          %v1133 = vadd.f32 0.0, %v1132
          %1134 = vmatmul.f32.gmra.mxu0 %v322
          %v1135 = vpop.f32.mrf.mxu0
          %v1136 = vadd.f32 0.0, %v1135
          %1137 = vdwg.mxu0
          %1138 = vst [vmem:[#allocation2 + $0x180] sm:$0xff] %v1110
          %1139 = vst [vmem:[#allocation2 + $0x188] sm:$0xff] %v1133
          %1140 = vst [vmem:[#allocation2 + $0x190] sm:$0xff] %v1113
          %1141 = vst [vmem:[#allocation2 + $0x198] sm:$0xff] %v1136
          %v1142 = vadd.s32 %v300, 208
          %v1143 = vadd.s32 %v301, 208
          %vm1144 = vcmp.eq.s32.totalorder %v303, %v1142
          %vm1145 = vcmp.eq.s32.totalorder %v304, %v1142
          %vm1146 = vcmp.eq.s32.totalorder %v303, %v1143
          %vm1147 = vcmp.eq.s32.totalorder %v304, %v1143
          %v1148 = vsel %vm1144, 1, 0
          %v1149 = vsel %vm1145, 1, 0
          %v1150 = vsel %vm1146, 1, 0
          %v1151 = vsel %vm1147, 1, 0
          %v1152 = vcvt.s32.f32 %v1148
          %v1153 = vcvt.s32.f32 %v1149
          %v1154 = vcvt.s32.f32 %v1150
          %v1155 = vcvt.s32.f32 %v1151
          %1156 = vmatpush.msra.mxu0 0.0
          %1157 = vmatpush.msra.mxu0 0.0
          %1158 = vmatpush.msra.mxu0 0.0
          %1159 = vmatpush.msra.mxu0 0.0
          %1160 = vmatpush.msra.mxu0 0.0
          %1161 = vmatpush.msra.mxu0 0.0
          %1162 = vmatpush.msra.mxu0 0.0
          %1163 = vmatpush.msra.mxu0 0.0
          %1164 = vmatpush.msra.mxu0 0.0
          %1165 = vmatpush.msra.mxu0 0.0
          %1166 = vmatpush.msra.mxu0 0.0
          %1167 = vmatpush.msra.mxu0 0.0
          %1168 = vmatpush.msra.mxu0 0.0
          %1169 = vmatpush.msra.mxu0 0.0
          %1170 = vmatpush.msra.mxu0 %v1154
          %1171 = vmatpush.msra.mxu0 %v1152
          %1172 = vmatmul.f32.gmra.mxu0 %v319
          %v1173 = vpop.f32.mrf.mxu0
          %v1174 = vadd.f32 0.0, %v1173
          %1175 = vmatmul.f32.gmra.mxu0 %v322
          %v1176 = vpop.f32.mrf.mxu0
          %v1177 = vadd.f32 0.0, %v1176
          %1178 = vdwg.mxu0
          %1179 = vmatpush.msra.mxu0 0.0
          %1180 = vmatpush.msra.mxu0 0.0
          %1181 = vmatpush.msra.mxu0 0.0
          %1182 = vmatpush.msra.mxu0 0.0
          %1183 = vmatpush.msra.mxu0 0.0
          %1184 = vmatpush.msra.mxu0 0.0
          %1185 = vmatpush.msra.mxu0 0.0
          %1186 = vmatpush.msra.mxu0 0.0
          %1187 = vmatpush.msra.mxu0 0.0
          %1188 = vmatpush.msra.mxu0 0.0
          %1189 = vmatpush.msra.mxu0 0.0
          %1190 = vmatpush.msra.mxu0 0.0
          %1191 = vmatpush.msra.mxu0 0.0
          %1192 = vmatpush.msra.mxu0 0.0
          %1193 = vmatpush.msra.mxu0 %v1155
          %1194 = vmatpush.msra.mxu0 %v1153
          %1195 = vmatmul.f32.gmra.mxu0 %v319
          %v1196 = vpop.f32.mrf.mxu0
          %v1197 = vadd.f32 0.0, %v1196
          %1198 = vmatmul.f32.gmra.mxu0 %v322
          %v1199 = vpop.f32.mrf.mxu0
          %v1200 = vadd.f32 0.0, %v1199
          %1201 = vdwg.mxu0
          %1202 = vst [vmem:[#allocation2 + $0x1a0] sm:$0xff] %v1174
          %1203 = vst [vmem:[#allocation2 + $0x1a8] sm:$0xff] %v1197
          %1204 = vst [vmem:[#allocation2 + $0x1b0] sm:$0xff] %v1177
          %1205 = vst [vmem:[#allocation2 + $0x1b8] sm:$0xff] %v1200
          %v1206 = vadd.s32 %v300, 224
          %v1207 = vadd.s32 %v301, 224
          %vm1208 = vcmp.eq.s32.totalorder %v303, %v1206
          %vm1209 = vcmp.eq.s32.totalorder %v304, %v1206
          %vm1210 = vcmp.eq.s32.totalorder %v303, %v1207
          %vm1211 = vcmp.eq.s32.totalorder %v304, %v1207
          %v1212 = vsel %vm1208, 1, 0
          %v1213 = vsel %vm1209, 1, 0
          %v1214 = vsel %vm1210, 1, 0
          %v1215 = vsel %vm1211, 1, 0
          %v1216 = vcvt.s32.f32 %v1212
          %v1217 = vcvt.s32.f32 %v1213
          %v1218 = vcvt.s32.f32 %v1214
          %v1219 = vcvt.s32.f32 %v1215
          %1220 = vmatpush.msra.mxu0 0.0
          %1221 = vmatpush.msra.mxu0 0.0
          %1222 = vmatpush.msra.mxu0 0.0
          %1223 = vmatpush.msra.mxu0 0.0
          %1224 = vmatpush.msra.mxu0 0.0
          %1225 = vmatpush.msra.mxu0 0.0
          %1226 = vmatpush.msra.mxu0 0.0
          %1227 = vmatpush.msra.mxu0 0.0
          %1228 = vmatpush.msra.mxu0 0.0
          %1229 = vmatpush.msra.mxu0 0.0
          %1230 = vmatpush.msra.mxu0 0.0
          %1231 = vmatpush.msra.mxu0 0.0
          %1232 = vmatpush.msra.mxu0 0.0
          %1233 = vmatpush.msra.mxu0 0.0
          %1234 = vmatpush.msra.mxu0 %v1218
          %1235 = vmatpush.msra.mxu0 %v1216
          %1236 = vmatmul.f32.gmra.mxu0 %v319
          %v1237 = vpop.f32.mrf.mxu0
          %v1238 = vadd.f32 0.0, %v1237
          %1239 = vmatmul.f32.gmra.mxu0 %v322
          %v1240 = vpop.f32.mrf.mxu0
          %v1241 = vadd.f32 0.0, %v1240
          %1242 = vdwg.mxu0
          %1243 = vmatpush.msra.mxu0 0.0
          %1244 = vmatpush.msra.mxu0 0.0
          %1245 = vmatpush.msra.mxu0 0.0
          %1246 = vmatpush.msra.mxu0 0.0
          %1247 = vmatpush.msra.mxu0 0.0
          %1248 = vmatpush.msra.mxu0 0.0
          %1249 = vmatpush.msra.mxu0 0.0
          %1250 = vmatpush.msra.mxu0 0.0
          %1251 = vmatpush.msra.mxu0 0.0
          %1252 = vmatpush.msra.mxu0 0.0
          %1253 = vmatpush.msra.mxu0 0.0
          %1254 = vmatpush.msra.mxu0 0.0
          %1255 = vmatpush.msra.mxu0 0.0
          %1256 = vmatpush.msra.mxu0 0.0
          %1257 = vmatpush.msra.mxu0 %v1219
          %1258 = vmatpush.msra.mxu0 %v1217
          %1259 = vmatmul.f32.gmra.mxu0 %v319
          %v1260 = vpop.f32.mrf.mxu0
          %v1261 = vadd.f32 0.0, %v1260
          %1262 = vmatmul.f32.gmra.mxu0 %v322
          %v1263 = vpop.f32.mrf.mxu0
          %v1264 = vadd.f32 0.0, %v1263
          %1265 = vdwg.mxu0
          %1266 = vst [vmem:[#allocation2 + $0x1c0] sm:$0xff] %v1238
          %1267 = vst [vmem:[#allocation2 + $0x1c8] sm:$0xff] %v1261
          %1268 = vst [vmem:[#allocation2 + $0x1d0] sm:$0xff] %v1241
          %1269 = vst [vmem:[#allocation2 + $0x1d8] sm:$0xff] %v1264
          %v1270 = vadd.s32 %v300, 240
          %v1271 = vadd.s32 %v301, 240
          %vm1272 = vcmp.eq.s32.totalorder %v303, %v1270
          %vm1273 = vcmp.eq.s32.totalorder %v304, %v1270
          %vm1274 = vcmp.eq.s32.totalorder %v303, %v1271
          %vm1275 = vcmp.eq.s32.totalorder %v304, %v1271
          %v1276 = vsel %vm1272, 1, 0
          %v1277 = vsel %vm1273, 1, 0
          %v1278 = vsel %vm1274, 1, 0
          %v1279 = vsel %vm1275, 1, 0
          %v1280 = vcvt.s32.f32 %v1276
          %v1281 = vcvt.s32.f32 %v1277
          %v1282 = vcvt.s32.f32 %v1278
          %v1283 = vcvt.s32.f32 %v1279
          %1284 = vmatpush.msra.mxu0 0.0
          %1285 = vmatpush.msra.mxu0 0.0
          %1286 = vmatpush.msra.mxu0 0.0
          %1287 = vmatpush.msra.mxu0 0.0
          %1288 = vmatpush.msra.mxu0 0.0
          %1289 = vmatpush.msra.mxu0 0.0
          %1290 = vmatpush.msra.mxu0 0.0
          %1291 = vmatpush.msra.mxu0 0.0
          %1292 = vmatpush.msra.mxu0 0.0
          %1293 = vmatpush.msra.mxu0 0.0
          %1294 = vmatpush.msra.mxu0 0.0
          %1295 = vmatpush.msra.mxu0 0.0
          %1296 = vmatpush.msra.mxu0 0.0
          %1297 = vmatpush.msra.mxu0 0.0
          %1298 = vmatpush.msra.mxu0 %v1282
          %1299 = vmatpush.msra.mxu0 %v1280
          %1300 = vmatmul.f32.gmra.mxu0 %v319
          %v1301 = vpop.f32.mrf.mxu0
          %v1302 = vadd.f32 0.0, %v1301
          %1303 = vmatmul.f32.gmra.mxu0 %v322
          %v1304 = vpop.f32.mrf.mxu0
          %v1305 = vadd.f32 0.0, %v1304
          %1306 = vdwg.mxu0
          %1307 = vmatpush.msra.mxu0 0.0
          %1308 = vmatpush.msra.mxu0 0.0
          %1309 = vmatpush.msra.mxu0 0.0
          %1310 = vmatpush.msra.mxu0 0.0
          %1311 = vmatpush.msra.mxu0 0.0
          %1312 = vmatpush.msra.mxu0 0.0
          %1313 = vmatpush.msra.mxu0 0.0
          %1314 = vmatpush.msra.mxu0 0.0
          %1315 = vmatpush.msra.mxu0 0.0
          %1316 = vmatpush.msra.mxu0 0.0
          %1317 = vmatpush.msra.mxu0 0.0
          %1318 = vmatpush.msra.mxu0 0.0
          %1319 = vmatpush.msra.mxu0 0.0
          %1320 = vmatpush.msra.mxu0 0.0
          %1321 = vmatpush.msra.mxu0 %v1283
          %1322 = vmatpush.msra.mxu0 %v1281
          %1323 = vmatmul.f32.gmra.mxu0 %v319
          %v1324 = vpop.f32.mrf.mxu0
          %v1325 = vadd.f32 0.0, %v1324
          %1326 = vmatmul.f32.gmra.mxu0 %v322
          %v1327 = vpop.f32.mrf.mxu0
          %v1328 = vadd.f32 0.0, %v1327
          %1329 = vdwg.mxu0
          %1330 = vst [vmem:[#allocation2 + $0x1e0] sm:$0xff] %v1302
          %1331 = vst [vmem:[#allocation2 + $0x1e8] sm:$0xff] %v1325
          %1332 = vst [vmem:[#allocation2 + $0x1f0] sm:$0xff] %v1305
          %1333 = vst [vmem:[#allocation2 + $0x1f8] sm:$0xff] %v1328
        $region48: #{tpu_custom_call.1} parent=31 // pred_fallthru
          _
        %v1334 = vld [vmem:[%s237] sm:$0xff]
        %v1335 = vld [vmem:[%s237 + $0x8] sm:$0xff]
        %v1336 = vld [vmem:[%s237 + $0x10] sm:$0xff]
        %v1337 = vld [vmem:[%s237 + $0x18] sm:$0xff]
        %v1338 = vld [vmem:[%s237 + $0x20] sm:$0xff]
        %v1339 = vld [vmem:[%s237 + $0x28] sm:$0xff]
        %v1340 = vld [vmem:[%s237 + $0x30] sm:$0xff]
        %v1341 = vld [vmem:[%s237 + $0x38] sm:$0xff]
        %v1342 = vld [vmem:[#allocation2] sm:$0xff]
        %v1343 = vld [vmem:[#allocation2 + $0x8] sm:$0xff]
        %v1344 = vld [vmem:[#allocation2 + $0x10] sm:$0xff]
        %v1345 = vld [vmem:[#allocation2 + $0x18] sm:$0xff]
        %v1346 = vld [vmem:[#allocation2 + $0x20] sm:$0xff]
        %v1347 = vld [vmem:[#allocation2 + $0x28] sm:$0xff]
        %v1348 = vld [vmem:[#allocation2 + $0x30] sm:$0xff]
        %v1349 = vld [vmem:[#allocation2 + $0x38] sm:$0xff]
        %v1350 = vld [vmem:[#allocation2 + $0x40] sm:$0xff]
        %v1351 = vld [vmem:[#allocation2 + $0x48] sm:$0xff]
        %v1352 = vld [vmem:[#allocation2 + $0x50] sm:$0xff]
        %v1353 = vld [vmem:[#allocation2 + $0x58] sm:$0xff]
        %v1354 = vld [vmem:[#allocation2 + $0x60] sm:$0xff]
        %v1355 = vld [vmem:[#allocation2 + $0x68] sm:$0xff]
        %v1356 = vld [vmem:[#allocation2 + $0x70] sm:$0xff]
        %v1357 = vld [vmem:[#allocation2 + $0x78] sm:$0xff]
        %v1358 = vld [vmem:[#allocation2 + $0x80] sm:$0xff]
        %v1359 = vld [vmem:[#allocation2 + $0x88] sm:$0xff]
        %v1360 = vld [vmem:[#allocation2 + $0x90] sm:$0xff]
        %v1361 = vld [vmem:[#allocation2 + $0x98] sm:$0xff]
        %v1362 = vld [vmem:[#allocation2 + $0xa0] sm:$0xff]
        %v1363 = vld [vmem:[#allocation2 + $0xa8] sm:$0xff]
        %v1364 = vld [vmem:[#allocation2 + $0xb0] sm:$0xff]
        %v1365 = vld [vmem:[#allocation2 + $0xb8] sm:$0xff]
        %v1366 = vld [vmem:[#allocation2 + $0xc0] sm:$0xff]
        %v1367 = vld [vmem:[#allocation2 + $0xc8] sm:$0xff]
        %v1368 = vld [vmem:[#allocation2 + $0xd0] sm:$0xff]
        %v1369 = vld [vmem:[#allocation2 + $0xd8] sm:$0xff]
        %v1370 = vld [vmem:[#allocation2 + $0xe0] sm:$0xff]
        %v1371 = vld [vmem:[#allocation2 + $0xe8] sm:$0xff]
        %v1372 = vld [vmem:[#allocation2 + $0xf0] sm:$0xff]
        %v1373 = vld [vmem:[#allocation2 + $0xf8] sm:$0xff]
        %v1374 = vld [vmem:[#allocation2 + $0x100] sm:$0xff]
        %v1375 = vld [vmem:[#allocation2 + $0x108] sm:$0xff]
        %v1376 = vld [vmem:[#allocation2 + $0x110] sm:$0xff]
        %v1377 = vld [vmem:[#allocation2 + $0x118] sm:$0xff]
        %v1378 = vld [vmem:[#allocation2 + $0x120] sm:$0xff]
        %v1379 = vld [vmem:[#allocation2 + $0x128] sm:$0xff]
        %v1380 = vld [vmem:[#allocation2 + $0x130] sm:$0xff]
        %v1381 = vld [vmem:[#allocation2 + $0x138] sm:$0xff]
        %v1382 = vld [vmem:[#allocation2 + $0x140] sm:$0xff]
        %v1383 = vld [vmem:[#allocation2 + $0x148] sm:$0xff]
        %v1384 = vld [vmem:[#allocation2 + $0x150] sm:$0xff]
        %v1385 = vld [vmem:[#allocation2 + $0x158] sm:$0xff]
        %v1386 = vld [vmem:[#allocation2 + $0x160] sm:$0xff]
        %v1387 = vld [vmem:[#allocation2 + $0x168] sm:$0xff]
        %v1388 = vld [vmem:[#allocation2 + $0x170] sm:$0xff]
        %v1389 = vld [vmem:[#allocation2 + $0x178] sm:$0xff]
        %v1390 = vld [vmem:[#allocation2 + $0x180] sm:$0xff]
        %v1391 = vld [vmem:[#allocation2 + $0x188] sm:$0xff]
        %v1392 = vld [vmem:[#allocation2 + $0x190] sm:$0xff]
        %v1393 = vld [vmem:[#allocation2 + $0x198] sm:$0xff]
        %v1394 = vld [vmem:[#allocation2 + $0x1a0] sm:$0xff]
        %v1395 = vld [vmem:[#allocation2 + $0x1a8] sm:$0xff]
        %v1396 = vld [vmem:[#allocation2 + $0x1b0] sm:$0xff]
        %v1397 = vld [vmem:[#allocation2 + $0x1b8] sm:$0xff]
        %v1398 = vld [vmem:[#allocation2 + $0x1c0] sm:$0xff]
        %v1399 = vld [vmem:[#allocation2 + $0x1c8] sm:$0xff]
        %v1400 = vld [vmem:[#allocation2 + $0x1d0] sm:$0xff]
        %v1401 = vld [vmem:[#allocation2 + $0x1d8] sm:$0xff]
        %v1402 = vld [vmem:[#allocation2 + $0x1e0] sm:$0xff]
        %v1403 = vld [vmem:[#allocation2 + $0x1e8] sm:$0xff]
        %v1404 = vld [vmem:[#allocation2 + $0x1f0] sm:$0xff]
        %v1405 = vld [vmem:[#allocation2 + $0x1f8] sm:$0xff]
        %1406 = vmatpush.msra.mxu0 %v1372
        %1407 = vmatpush.msra.mxu0 %v1370
        %1408 = vmatpush.msra.mxu0 %v1368
        %1409 = vmatpush.msra.mxu0 %v1366
        %1410 = vmatpush.msra.mxu0 %v1364
        %1411 = vmatpush.msra.mxu0 %v1362
        %1412 = vmatpush.msra.mxu0 %v1360
        %1413 = vmatpush.msra.mxu0 %v1358
        %1414 = vmatpush.msra.mxu0 %v1356
        %1415 = vmatpush.msra.mxu0 %v1354
        %1416 = vmatpush.msra.mxu0 %v1352
        %1417 = vmatpush.msra.mxu0 %v1350
        %1418 = vmatpush.msra.mxu0 %v1348
        %1419 = vmatpush.msra.mxu0 %v1346
        %1420 = vmatpush.msra.mxu0 %v1344
        %1421 = vmatpush.msra.mxu0 %v1342
        %1422 = vmatmul.f32.gmra.mxu0 %v1334
        %v1423 = vpop.f32.mrf.mxu0
        %v1424 = vadd.f32 0.0, %v1423
        %1425 = vmatmul.f32.gmra.mxu0 %v1336
        %v1426 = vpop.f32.mrf.mxu0
        %v1427 = vadd.f32 0.0, %v1426
        %1428 = vmatmul.f32.gmra.mxu0 %v1338
        %v1429 = vpop.f32.mrf.mxu0
        %v1430 = vadd.f32 0.0, %v1429
        %1431 = vmatmul.f32.gmra.mxu0 %v1340
        %v1432 = vpop.f32.mrf.mxu0
        %v1433 = vadd.f32 0.0, %v1432
        %1434 = vdwg.mxu0
        %1435 = vmatpush.msra.mxu0 %v1404
        %1436 = vmatpush.msra.mxu0 %v1402
        %1437 = vmatpush.msra.mxu0 %v1400
        %1438 = vmatpush.msra.mxu0 %v1398
        %1439 = vmatpush.msra.mxu0 %v1396
        %1440 = vmatpush.msra.mxu0 %v1394
        %1441 = vmatpush.msra.mxu0 %v1392
        %1442 = vmatpush.msra.mxu0 %v1390
        %1443 = vmatpush.msra.mxu0 %v1388
        %1444 = vmatpush.msra.mxu0 %v1386
        %1445 = vmatpush.msra.mxu0 %v1384
        %1446 = vmatpush.msra.mxu0 %v1382
        %1447 = vmatpush.msra.mxu0 %v1380
        %1448 = vmatpush.msra.mxu0 %v1378
        %1449 = vmatpush.msra.mxu0 %v1376
        %1450 = vmatpush.msra.mxu0 %v1374
        %1451 = vmatmul.f32.gmra.mxu0 %v1335
        %v1452 = vpop.f32.mrf.mxu0
        %v1453 = vadd.f32 %v1424, %v1452
        %1454 = vmatmul.f32.gmra.mxu0 %v1337
        %v1455 = vpop.f32.mrf.mxu0
        %v1456 = vadd.f32 %v1427, %v1455
        %1457 = vmatmul.f32.gmra.mxu0 %v1339
        %v1458 = vpop.f32.mrf.mxu0
        %v1459 = vadd.f32 %v1430, %v1458
        %1460 = vmatmul.f32.gmra.mxu0 %v1341
        %v1461 = vpop.f32.mrf.mxu0
        %v1462 = vadd.f32 %v1433, %v1461
        %1463 = vdwg.mxu0
        %1464 = vmatpush.msra.mxu0 %v1373
        %1465 = vmatpush.msra.mxu0 %v1371
        %1466 = vmatpush.msra.mxu0 %v1369
        %1467 = vmatpush.msra.mxu0 %v1367
        %1468 = vmatpush.msra.mxu0 %v1365
        %1469 = vmatpush.msra.mxu0 %v1363
        %1470 = vmatpush.msra.mxu0 %v1361
        %1471 = vmatpush.msra.mxu0 %v1359
        %1472 = vmatpush.msra.mxu0 %v1357
        %1473 = vmatpush.msra.mxu0 %v1355
        %1474 = vmatpush.msra.mxu0 %v1353
        %1475 = vmatpush.msra.mxu0 %v1351
        %1476 = vmatpush.msra.mxu0 %v1349
        %1477 = vmatpush.msra.mxu0 %v1347
        %1478 = vmatpush.msra.mxu0 %v1345
        %1479 = vmatpush.msra.mxu0 %v1343
        %1480 = vmatmul.f32.gmra.mxu0 %v1334
        %v1481 = vpop.f32.mrf.mxu0
        %v1482 = vadd.f32 0.0, %v1481
        %1483 = vmatmul.f32.gmra.mxu0 %v1336
        %v1484 = vpop.f32.mrf.mxu0
        %v1485 = vadd.f32 0.0, %v1484
        %1486 = vmatmul.f32.gmra.mxu0 %v1338
        %v1487 = vpop.f32.mrf.mxu0
        %v1488 = vadd.f32 0.0, %v1487
        %1489 = vmatmul.f32.gmra.mxu0 %v1340
        %v1490 = vpop.f32.mrf.mxu0
        %v1491 = vadd.f32 0.0, %v1490
        %1492 = vdwg.mxu0
        %1493 = vmatpush.msra.mxu0 %v1405
        %1494 = vmatpush.msra.mxu0 %v1403
        %1495 = vmatpush.msra.mxu0 %v1401
        %1496 = vmatpush.msra.mxu0 %v1399
        %1497 = vmatpush.msra.mxu0 %v1397
        %1498 = vmatpush.msra.mxu0 %v1395
        %1499 = vmatpush.msra.mxu0 %v1393
        %1500 = vmatpush.msra.mxu0 %v1391
        %1501 = vmatpush.msra.mxu0 %v1389
        %1502 = vmatpush.msra.mxu0 %v1387
        %1503 = vmatpush.msra.mxu0 %v1385
        %1504 = vmatpush.msra.mxu0 %v1383
        %1505 = vmatpush.msra.mxu0 %v1381
        %1506 = vmatpush.msra.mxu0 %v1379
        %1507 = vmatpush.msra.mxu0 %v1377
        %1508 = vmatpush.msra.mxu0 %v1375
        %1509 = vmatmul.f32.gmra.mxu0 %v1335
        %v1510 = vpop.f32.mrf.mxu0
        %v1511 = vadd.f32 %v1482, %v1510
        %1512 = vmatmul.f32.gmra.mxu0 %v1337
        %v1513 = vpop.f32.mrf.mxu0
        %v1514 = vadd.f32 %v1485, %v1513
        %1515 = vmatmul.f32.gmra.mxu0 %v1339
        %v1516 = vpop.f32.mrf.mxu0
        %v1517 = vadd.f32 %v1488, %v1516
        %1518 = vmatmul.f32.gmra.mxu0 %v1341
        %v1519 = vpop.f32.mrf.mxu0
        %v1520 = vadd.f32 %v1491, %v1519
        %1521 = vdwg.mxu0
        %v1522 = vld [vmem:[%s247] sm:$0xff]
        %v1523 = vld [vmem:[%s247 + $0x8] sm:$0xff]
        %vm1524 = vcmask 130048
        %v1526 = vsel %vm1524, %v1522, 0
        %v1529 = vsel %vm1524, %v1523, 0
        %1531 = vmatpush.msra.mxu0 0.0
        %1532 = vmatpush.msra.mxu0 0.0
        %1533 = vmatpush.msra.mxu0 0.0
        %1534 = vmatpush.msra.mxu0 0.0
        %1535 = vmatpush.msra.mxu0 0.0
        %1536 = vmatpush.msra.mxu0 0.0
        %1537 = vmatpush.msra.mxu0 0.0
        %1538 = vmatpush.msra.mxu0 0.0
        %1539 = vmatpush.msra.mxu0 0.0
        %1540 = vmatpush.msra.mxu0 0.0
        %1541 = vmatpush.msra.mxu0 0.0
        %1542 = vmatpush.msra.mxu0 0.0
        %1543 = vmatpush.msra.mxu0 0.0
        %1544 = vmatpush.msra.mxu0 0.0
        %1545 = vmatpush.msra.mxu0 %v1456
        %1546 = vmatpush.msra.mxu0 %v1453
        %1547 = vmatmul.f32.gmra.mxu0 %v1526
        %v1548 = vpop.f32.mrf.mxu0
        %v1549 = vadd.f32 0.0, %v1548
        %1550 = vmatmul.f32.gmra.mxu0 %v1529
        %v1551 = vpop.f32.mrf.mxu0
        %v1552 = vadd.f32 0.0, %v1551
        %1553 = vdwg.mxu0
        %1554 = vmatpush.msra.mxu0 0.0
        %1555 = vmatpush.msra.mxu0 0.0
        %1556 = vmatpush.msra.mxu0 0.0
        %1557 = vmatpush.msra.mxu0 0.0
        %1558 = vmatpush.msra.mxu0 0.0
        %1559 = vmatpush.msra.mxu0 0.0
        %1560 = vmatpush.msra.mxu0 0.0
        %1561 = vmatpush.msra.mxu0 0.0
        %1562 = vmatpush.msra.mxu0 0.0
        %1563 = vmatpush.msra.mxu0 0.0
        %1564 = vmatpush.msra.mxu0 0.0
        %1565 = vmatpush.msra.mxu0 0.0
        %1566 = vmatpush.msra.mxu0 0.0
        %1567 = vmatpush.msra.mxu0 0.0
        %1568 = vmatpush.msra.mxu0 %v1514
        %1569 = vmatpush.msra.mxu0 %v1511
        %1570 = vmatmul.f32.gmra.mxu0 %v1526
        %v1571 = vpop.f32.mrf.mxu0
        %v1572 = vadd.f32 0.0, %v1571
        %1573 = vmatmul.f32.gmra.mxu0 %v1529
        %v1574 = vpop.f32.mrf.mxu0
        %v1575 = vadd.f32 0.0, %v1574
        %1576 = vdwg.mxu0
        %1577 = vst [vmem:[%s290] sm:$0xff] %v1549
        %1578 = vst [vmem:[%s290 + $0x8] sm:$0xff] %v1572
        %1579 = vst [vmem:[%s290 + $0x10] sm:$0xff] %v1552
        %1580 = vst [vmem:[%s290 + $0x18] sm:$0xff] %v1575
        %1581 = vmatpush.msra.mxu0 0.0
        %1582 = vmatpush.msra.mxu0 0.0
        %1583 = vmatpush.msra.mxu0 0.0
        %1584 = vmatpush.msra.mxu0 0.0
        %1585 = vmatpush.msra.mxu0 0.0
        %1586 = vmatpush.msra.mxu0 0.0
        %1587 = vmatpush.msra.mxu0 0.0
        %1588 = vmatpush.msra.mxu0 0.0
        %1589 = vmatpush.msra.mxu0 0.0
        %1590 = vmatpush.msra.mxu0 0.0
        %1591 = vmatpush.msra.mxu0 0.0
        %1592 = vmatpush.msra.mxu0 0.0
        %1593 = vmatpush.msra.mxu0 0.0
        %1594 = vmatpush.msra.mxu0 0.0
        %1595 = vmatpush.msra.mxu0 %v1462
        %1596 = vmatpush.msra.mxu0 %v1459
        %1597 = vmatmul.f32.gmra.mxu0 %v1526
        %v1598 = vpop.f32.mrf.mxu0
        %v1599 = vadd.f32 0.0, %v1598
        %1600 = vmatmul.f32.gmra.mxu0 %v1529
        %v1601 = vpop.f32.mrf.mxu0
        %v1602 = vadd.f32 0.0, %v1601
        %1603 = vdwg.mxu0
        %1604 = vmatpush.msra.mxu0 0.0
        %1605 = vmatpush.msra.mxu0 0.0
        %1606 = vmatpush.msra.mxu0 0.0
        %1607 = vmatpush.msra.mxu0 0.0
        %1608 = vmatpush.msra.mxu0 0.0
        %1609 = vmatpush.msra.mxu0 0.0
        %1610 = vmatpush.msra.mxu0 0.0
        %1611 = vmatpush.msra.mxu0 0.0
        %1612 = vmatpush.msra.mxu0 0.0
        %1613 = vmatpush.msra.mxu0 0.0
        %1614 = vmatpush.msra.mxu0 0.0
        %1615 = vmatpush.msra.mxu0 0.0
        %1616 = vmatpush.msra.mxu0 0.0
        %1617 = vmatpush.msra.mxu0 0.0
        %1618 = vmatpush.msra.mxu0 %v1520
        %1619 = vmatpush.msra.mxu0 %v1517
        %1620 = vmatmul.f32.gmra.mxu0 %v1526
        %v1621 = vpop.f32.mrf.mxu0
        %v1622 = vadd.f32 0.0, %v1621
        %1623 = vmatmul.f32.gmra.mxu0 %v1529
        %v1624 = vpop.f32.mrf.mxu0
        %v1625 = vadd.f32 0.0, %v1624
        %1626 = vdwg.mxu0
        %1627 = vst [vmem:[%s290 + $0x20] sm:$0xff] %v1599
        %1628 = vst [vmem:[%s290 + $0x28] sm:$0xff] %v1622
        %1629 = vst [vmem:[%s290 + $0x30] sm:$0xff] %v1602
        %1630 = vst [vmem:[%s290 + $0x38] sm:$0xff] %v1625
        %s1631 = sand.u32 %s125, 1
        %s1632 = scalar_lea.sflag [#allocation5], %s1631
        %s1633 = sand.u32 %s125, 1
        %s1634 = smul.addr %s1633, 64
        %s1635 = scalar_lea.vmem [#allocation9], %s1634
        // Predicated region
        $region49: #{tpu_custom_call.1} parent=31 // pred_check
          %p1636 = pneg %p135
        $region50: #{tpu_custom_call.1} parent=31 // pred_check_branch
          %1638 = sbr.rel (%p1636) target = $region52
        $region51: #{tpu_custom_call.1} parent=31 // pred_region
          %s1639 = smul.u32 4, %s28
          %1641 = vsyncadd %s1632, 0
          %s1642 = smul.addr %s1639, 2
          %s1643 = smul.addr %s27, 8
          %s1644 = sadd.s32 %s1642, %s1643
          %s1645 = smul.addr %s1644, 8
          %s1646 = scalar_lea.hbm %s3, %s1645
          %s1647 = sshll.u32 %s1635, 4
          %s1648 = int_to_ptr.vmem [resolvable:$true] %s1647
          %s1649 = sshll.u32 %s1646, 4
          %s1650 = int_to_ptr.hbm [resolvable:$true] %s1649
          %1655 = dma.vmem_to_hbm [thread:$0]  %s1648, 1024, %s1650, %s1632, 256, 256, 16
        $region52: #{tpu_custom_call.1} parent=31 // pred_fallthru
          _
      $region32: #{tpu_custom_call.1} parent=5 // pred_fallthru
        _
      %p1656 = scmp.le.s32.totalorder 2, %s18
      // Predicated region
      $region53: #{tpu_custom_call.1} parent=5 // pred_check
        %p1657 = pneg %p1656
      $region54: #{tpu_custom_call.1} parent=5 // pred_check_branch
        %1659 = sbr.rel (%p1657) target = $region56
      $region55: #{tpu_custom_call.1} parent=5 // pred_region
        %s1660 = ssub.s32 %s18, 2
        // Predicated region
        $region57: #{tpu_custom_call.1} parent=55 // pred_check
          %p1661 = pneg %p141
        $region58: #{tpu_custom_call.1} parent=55 // pred_check_branch
          %1663 = sbr.rel (%p1661) target = $region60
        $region59: #{tpu_custom_call.1} parent=55 // pred_region
          %s1664 = sand.u32 %s126, 1
          %s1665 = scalar_lea.sflag [#allocation5], %s1664
          %s1666 = sand.u32 %s126, 1
          %s1667 = smul.addr %s1666, 64
          %s1668 = scalar_lea.vmem [#allocation9], %s1667
          %1670 = dma.done %s1665, 1024
        $region60: #{tpu_custom_call.1} parent=55 // pred_fallthru
          _
      $region56: #{tpu_custom_call.1} parent=5 // pred_fallthru
        _
    $region6: #{tpu_custom_call.1} parent=1 // loop_footer
      %s22 = sadd.s32 1, %s18
    $region7: #{tpu_custom_call.1} parent=1 // loop_footer_branch
      %17 = sbr.rel target = $region3
    $region8: #{tpu_custom_call.1} parent=1 // loop_exit
      _
    %1671 = vsyncpa [#allocation4], 1
    %s1672 = scalar_lea.sflag [#allocation4], 1
    %1673 = vsyncpa %s1672, 1
    %1674 = vsyncpa [#allocation7], 1
    %s1675 = scalar_lea.sflag [#allocation7], 1
    %1676 = vsyncpa %s1675, 1
    %1677 = vsyncpa [#allocation5], 1
    %s1678 = scalar_lea.sflag [#allocation5], 1
    %1679 = vsyncpa %s1678, 1

</llo_original>
